<compile_context>
chip_gen: v7x
topology: tpu7x:2x2x1
jax: 0.10.0
libtpu: 0.0.40
codegen_flags: <defaults>
</compile_context>

<pallas_src>
import functools

import numpy as np
import jax
import jax.numpy as jnp
from jax.experimental import pallas as pl
from jax.experimental.pallas import tpu as pltpu

# Constants mirroring the module-level globals in the training script.
# (PATCH size kept small for the self-contained demo; kernel is generic in H, W.)
PATCH_H = 16
PATCH_W = 16
S2 = 4.0
A = -1.0 / (2.0 * S2)
ALPHA = 0.5          # present in __init__, unused in forward (parity only)
SMOOTH = 1e-6

_BLOCK_BYTES = 4 << 20       # target ~4 MiB heatmap slab per grid step
_MAX_TN = 8192               # cap rows/step (kept a multiple of 8)
_MXU_ONES_BYTES = 8 << 20    # max resident ones-matrix size for the MXU path


def _round_up(x, m):
    return ((x + m - 1) // m) * m


def _vmem_limit_bytes():
    # ~75% of physical VMEM: ~48 MiB on v7x (64 MiB/TC), ~96 MiB on v5e/v6e.
    try:
        cap = int(pltpu.get_tpu_info().vmem_capacity_bytes)
    except Exception:
        cap = 64 << 20
    return max(32 << 20, min(96 << 20, (cap * 3) // 4))


def _myloss_kernel(hm_ref, row_ref, maps_ref, ones_ref, pd_ref, pc_ref,
                   *, smooth, use_mxu):
    hm = hm_ref[...]                       # (tn, HW) f32 heatmap rows
    rows = row_ref[...]                    # (tn, 8)  packed [u, v, s, valid, 0..]
    u = rows[:, 0:1]
    v = rows[:, 1:2]
    s = rows[:, 2:3]
    valid = rows[:, 3:4]                   # 1.0 valid row / 0.0 invalid-or-pad

    maps = maps_ref[...]                   # (8, HW) resident maps
    xi = maps[0:1, :]                      # x = k % W
    yi = maps[1:2, :]                      # y = k // W
    r = maps[2:3, :]                       # A * (x^2 + y^2)

    # exp(A*((x-cx)^2+(y-cy)^2)) == exp(r + u*x + v*y + s); no dx/dy temporaries.
    g = jnp.exp(u * xi + v * yi + r + s)   # (tn, HW)

    if use_mxu:
        # Lane-axis reductions on the (otherwise idle) MXU instead of the XLU.
        ones = ones_ref[...]               # (HW, 128) resident ones
        hi = jax.lax.Precision.HIGHEST
        gh = jnp.dot(g * hm, ones, precision=hi,
                     preferred_element_type=jnp.float32)[:, 0:1]
        gg = jnp.dot(g * g, ones, precision=hi,
                     preferred_element_type=jnp.float32)[:, 0:1]
        hh = jnp.dot(hm * hm, ones, precision=hi,
                     preferred_element_type=jnp.float32)[:, 0:1]
    else:
        gh = jnp.sum(g * hm, axis=1, keepdims=True)
        gg = jnp.sum(g * g, axis=1, keepdims=True)
        hh = jnp.sum(hm * hm, axis=1, keepdims=True)

    d = 1.0 - (gh * gh) / (gg * hh + smooth)       # (tn, 1) per-row D
    # Mask BEFORE the row reduction so NaN/Inf garbage from padded / invalid
    # rows can never reach the partial sums.
    d = jnp.where(valid > 0.5, d, 0.0)

    sd = jnp.sum(d, axis=0, keepdims=True)         # (1, 1) partial loss sum
    sc = jnp.sum(valid, axis=0, keepdims=True)     # (1, 1) partial valid count
    # Lane-dense (1, 128) per-step outputs (scalar broadcast over the lanes).
    pd_ref[...] = jnp.broadcast_to(sd, (1, 128))
    pc_ref[...] = jnp.broadcast_to(sc, (1, 128))


def my_loss(heatmaps, centers, *, alpha=ALPHA, smooth=SMOOTH,
            block_rows=None, use_mxu=None):
    """JAX/Pallas equivalent of myLoss.forward.

    heatmaps: (..., H, W) float array (e.g. NCHW); centers: (..., 2) with
    possible NaN rows (those samples are excluded from the mean).
    """
    del alpha  # unused in forward, kept for signature parity
    H, W = heatmaps.shape[-2], heatmaps.shape[-1]
    hw = H * W
    hm = heatmaps.reshape(-1, hw).astype(jnp.float32)
    ctr = centers.reshape(-1, 2).astype(jnp.float32)
    n = hm.shape[0]

    if use_mxu is None:
        # MXU row-sum path only while the resident ones matrix stays small.
        use_mxu = hw * 128 * 4 <= _MXU_ONES_BYTES

    # Rows per grid step: multiple of 8, ~4 MiB heatmap slab, capped; keep
    # >= ~4 grid steps when possible so the "parallel" axis feeds both v7x TCs.
    if block_rows is None:
        tn = min(_MAX_TN, max(8, _BLOCK_BYTES // (hw * 4)))
    else:
        tn = max(8, int(block_rows))
    tn = min(tn, _round_up(n, 8))
    tn = min(tn, max(8, _round_up((n + 3) // 4, 8)))
    tn = max(8, (tn // 8) * 8)

    steps = (n + tn - 1) // tn
    n_pad = steps * tn

    # Per-row scalars precomputed in plain XLA (tiny): validity mask plus the
    # affine Gaussian-argument coefficients u=-2A*cx, v=-2A*cy, s=A*(cx^2+cy^2),
    # packed into one (n_pad, 8) array.  NaN centers -> valid=0 and finite 0
    # coefficients, so in-kernel row arithmetic never produces NaN from them.
    valid = jnp.logical_not(jnp.any(jnp.isnan(ctr), axis=1, keepdims=True))
    cx = jnp.where(valid, ctr[:, 0:1], 0.0)
    cy = jnp.where(valid, ctr[:, 1:2], 0.0)
    u = (-2.0 * A) * cx
    v = (-2.0 * A) * cy
    s = A * (cx * cx + cy * cy)
    rows = jnp.concatenate(
        [u, v, s, valid.astype(jnp.float32), jnp.zeros((n, 4), jnp.float32)],
        axis=1)                                               # (n, 8)
    if n_pad != n:
        # Pad ONLY the tiny per-row array (valid=0); the big heatmap tensor is
        # never copied — the ragged last block's garbage rows are masked.
        rows = jnp.pad(rows, ((0, n_pad - n), (0, 0)))

    # Resident coordinate maps packed into a single (8, HW) block:
    # row 0 = x (k % W), row 1 = y (k // W), row 2 = A*(x^2 + y^2).
    k = jnp.arange(hw, dtype=jnp.int32)
    xm = (k % W).astype(jnp.float32)
    ym = (k // W).astype(jnp.float32)
    rm = A * (xm * xm + ym * ym)
    maps = jnp.zeros((8, hw), jnp.float32)
    maps = maps.at[0].set(xm).at[1].set(ym).at[2].set(rm)

    # Resident ones matrix for the MXU row-sum path (tiny dummy otherwise).
    ones = jnp.ones((hw, 128) if use_mxu else (8, 128), jnp.float32)

    kernel = functools.partial(_myloss_kernel, smooth=smooth, use_mxu=use_mxu)
    part_d, part_c = pl.pallas_call(
        kernel,
        out_shape=(jax.ShapeDtypeStruct((1, steps * 128), jnp.float32),
                   jax.ShapeDtypeStruct((1, steps * 128), jnp.float32)),
        grid_spec=pltpu.PrefetchScalarGridSpec(
            num_scalar_prefetch=0,
            grid=(steps,),
            in_specs=[
                pl.BlockSpec((tn, hw), lambda i: (i, 0)),      # heatmap slab
                pl.BlockSpec((tn, 8), lambda i: (i, 0)),       # per-row scalars
                pl.BlockSpec((8, hw), lambda i: (0, 0)),       # maps (resident)
                pl.BlockSpec(ones.shape, lambda i: (0, 0)),    # ones (resident)
            ],
            out_specs=(pl.BlockSpec((1, 128), lambda i: (0, i)),
                       pl.BlockSpec((1, 128), lambda i: (0, i))),
        ),
        compiler_params=pltpu.CompilerParams(
            dimension_semantics=("parallel",),
            vmem_limit_bytes=_vmem_limit_bytes()),
    )(hm, rows, maps, ones)

    # `steps` lane-dense partials -> final scalar (padded/invalid rows added 0).
    sum_d = jnp.sum(part_d.reshape(steps, 128)[:, 0])
    cnt = jnp.sum(part_c.reshape(steps, 128)[:, 0])
    return sum_d / cnt


def my_loss_ref(heatmaps, centers, smooth=SMOOTH):
    """Pure NumPy reference replicating the PyTorch forward exactly."""
    H, W = heatmaps.shape[-2], heatmaps.shape[-1]
    hm = np.asarray(heatmaps, np.float32).reshape(-1, H * W)
    ct = np.asarray(centers, np.float32).reshape(-1, 2)
    m = np.isnan(ct).sum(1) == 0
    hm = hm[m]
    ct = ct[m]
    x_map = np.tile(np.arange(W, dtype=np.float32), (H, 1))           # x_map
    y_map = np.tile(np.arange(H, dtype=np.float32)[:, None], (1, W))  # y_map.T
    idx = np.stack([x_map, y_map])[None]                              # (1,2,H,W)
    d = idx - ct.reshape(-1, 2, 1, 1)
    sq = (d * d).sum(1)
    g = np.exp(A * sq).reshape(-1, H * W)
    num = (g * hm).sum(-1) ** 2
    den = (g * g).sum(-1) * (hm * hm).sum(-1) + smooth
    D = 1.0 - num / den
    return D.mean()


if __name__ == "__main__":
    key = jax.random.PRNGKey(0)
    k1, k2, k3, k4 = jax.random.split(key, 4)

    # Case 1: B*C = 8 rows, one NaN (invalid) sample -> masking path, MXU sums.
    B, C, H, W = 2, 4, PATCH_H, PATCH_W
    hm1 = jax.random.uniform(k1, (B, C, H, W), dtype=jnp.float32)
    ct1 = jax.random.uniform(k2, (B, C, 2), dtype=jnp.float32) * (W - 1)
    ct1 = ct1.at[0, 1, :].set(jnp.nan)
    out1 = jax.block_until_ready(my_loss(hm1, ct1))
    ref1 = my_loss_ref(np.asarray(hm1), np.asarray(ct1))
    assert np.allclose(np.asarray(out1), ref1, rtol=1e-4, atol=1e-6), (out1, ref1)

    # Case 2: ragged row count (B*C = 9) with a forced small tile so the
    # multi-step grid + zero-padded per-row-scalars masking path runs.
    B2, C2 = 3, 3
    hm2 = jax.random.uniform(k3, (B2, C2, H, W), dtype=jnp.float32)
    ct2 = jax.random.uniform(k4, (B2, C2, 2), dtype=jnp.float32) * (W - 1)
    ct2 = ct2.at[1, 2, :].set(jnp.nan)
    out2 = jax.block_until_ready(my_loss(hm2, ct2, block_rows=8))
    ref2 = my_loss_ref(np.asarray(hm2), np.asarray(ct2))
    assert np.allclose(np.asarray(out2), ref2, rtol=1e-4, atol=1e-6), (out2, ref2)

    # Case 3: same data through the non-MXU (jnp.sum) reduction fallback path.
    out3 = jax.block_until_ready(my_loss(hm2, ct2, block_rows=8, use_mxu=False))
    assert np.allclose(np.asarray(out3), ref2, rtol=1e-4, atol=1e-6), (out3, ref2)

    print("KERNEL_OK")
</pallas_src>

<mosaic_0001>
module attributes {stable_mosaic.version = 11 : i64} {
  func.func @_myloss_kernel(%arg0: i32, %arg1: memref<8x256xf32, #tpu.memory_space<vmem>>, %arg2: memref<8x8xf32, #tpu.memory_space<vmem>>, %arg3: memref<8x256xf32, #tpu.memory_space<vmem>>, %arg4: memref<256x128xf32, #tpu.memory_space<vmem>>, %arg5: memref<1x128xf32, #tpu.memory_space<vmem>>, %arg6: memref<1x128xf32, #tpu.memory_space<vmem>>) attributes {dimension_semantics = [#tpu.dimension_semantics<parallel>], iteration_bounds = array<i64: 1>, scalar_prefetch = 0 : i64, scratch_operands = 0 : i64, tpu.core_type = #tpu.core_type<tc>, window_params = [{transform_indices = @transform_0, window_bounds = array<i64: 8, 256>}, {transform_indices = @transform_1, window_bounds = array<i64: 8, 8>}, {pipeline_mode = #tpu.pipeline_mode<synchronous>, transform_indices = @transform_2, window_bounds = array<i64: 8, 256>}, {pipeline_mode = #tpu.pipeline_mode<synchronous>, transform_indices = @transform_3, window_bounds = array<i64: 256, 128>}, {transform_indices = @transform_4, window_bounds = array<i64: 1, 128>}, {transform_indices = @transform_5, window_bounds = array<i64: 1, 128>}]} {
    %c0 = arith.constant 0 : index
    %c0_0 = arith.constant 0 : index
    %0 = vector.load %arg1[%c0, %c0_0] : memref<8x256xf32, #tpu.memory_space<vmem>>, vector<8x256xf32>
    %c0_1 = arith.constant 0 : index
    %c0_2 = arith.constant 0 : index
    %1 = vector.load %arg2[%c0_1, %c0_2] : memref<8x8xf32, #tpu.memory_space<vmem>>, vector<8x8xf32>
    %2 = vector.extract_strided_slice %1 {offsets = [0, 0], sizes = [8, 1], strides = [1, 1]} : vector<8x8xf32> to vector<8x1xf32>
    %3 = vector.extract_strided_slice %1 {offsets = [0, 1], sizes = [8, 1], strides = [1, 1]} : vector<8x8xf32> to vector<8x1xf32>
    %4 = vector.extract_strided_slice %1 {offsets = [0, 2], sizes = [8, 1], strides = [1, 1]} : vector<8x8xf32> to vector<8x1xf32>
    %5 = vector.extract_strided_slice %1 {offsets = [0, 3], sizes = [8, 1], strides = [1, 1]} : vector<8x8xf32> to vector<8x1xf32>
    %c0_3 = arith.constant 0 : index
    %c0_4 = arith.constant 0 : index
    %6 = vector.load %arg3[%c0_3, %c0_4] : memref<8x256xf32, #tpu.memory_space<vmem>>, vector<8x256xf32>
    %7 = vector.extract_strided_slice %6 {offsets = [0, 0], sizes = [1, 256], strides = [1, 1]} : vector<8x256xf32> to vector<1x256xf32>
    %8 = vector.extract_strided_slice %6 {offsets = [1, 0], sizes = [1, 256], strides = [1, 1]} : vector<8x256xf32> to vector<1x256xf32>
    %9 = vector.extract_strided_slice %6 {offsets = [2, 0], sizes = [1, 256], strides = [1, 1]} : vector<8x256xf32> to vector<1x256xf32>
    %10 = vector.broadcast %2 : vector<8x1xf32> to vector<8x256xf32>
    %11 = vector.broadcast %7 : vector<1x256xf32> to vector<8x256xf32>
    %12 = arith.mulf %10, %11 : vector<8x256xf32>
    %13 = vector.broadcast %3 : vector<8x1xf32> to vector<8x256xf32>
    %14 = vector.broadcast %8 : vector<1x256xf32> to vector<8x256xf32>
    %15 = arith.mulf %13, %14 : vector<8x256xf32>
    %16 = arith.addf %12, %15 : vector<8x256xf32>
    %17 = vector.broadcast %9 : vector<1x256xf32> to vector<8x256xf32>
    %18 = arith.addf %16, %17 : vector<8x256xf32>
    %19 = vector.broadcast %4 : vector<8x1xf32> to vector<8x256xf32>
    %20 = arith.addf %18, %19 : vector<8x256xf32>
    %21 = math.exp %20 : vector<8x256xf32>
    %c0_5 = arith.constant 0 : index
    %c0_6 = arith.constant 0 : index
    %22 = vector.load %arg4[%c0_5, %c0_6] : memref<256x128xf32, #tpu.memory_space<vmem>>, vector<256x128xf32>
    %23 = arith.mulf %21, %0 : vector<8x256xf32>
    %cst = arith.constant dense<0.000000e+00> : vector<8x128xf32>
    %24 = tpu.matmul %23, %22, %cst {dimension_numbers = #tpu.dot_dimension_numbers<[1], [0], [0], [1], [0, 0, 1, 1], [], []>, precision = #tpu.contract_precision<fp32>} : vector<8x256xf32>, vector<256x128xf32>, vector<8x128xf32> -> vector<8x128xf32>
    %25 = vector.extract_strided_slice %24 {offsets = [0, 0], sizes = [8, 1], strides = [1, 1]} : vector<8x128xf32> to vector<8x1xf32>
    %26 = arith.mulf %21, %21 : vector<8x256xf32>
    %cst_7 = arith.constant dense<0.000000e+00> : vector<8x128xf32>
    %27 = tpu.matmul %26, %22, %cst_7 {dimension_numbers = #tpu.dot_dimension_numbers<[1], [0], [0], [1], [0, 0, 1, 1], [], []>, precision = #tpu.contract_precision<fp32>} : vector<8x256xf32>, vector<256x128xf32>, vector<8x128xf32> -> vector<8x128xf32>
    %28 = vector.extract_strided_slice %27 {offsets = [0, 0], sizes = [8, 1], strides = [1, 1]} : vector<8x128xf32> to vector<8x1xf32>
    %29 = arith.mulf %0, %0 : vector<8x256xf32>
    %cst_8 = arith.constant dense<0.000000e+00> : vector<8x128xf32>
    %30 = tpu.matmul %29, %22, %cst_8 {dimension_numbers = #tpu.dot_dimension_numbers<[1], [0], [0], [1], [0, 0, 1, 1], [], []>, precision = #tpu.contract_precision<fp32>} : vector<8x256xf32>, vector<256x128xf32>, vector<8x128xf32> -> vector<8x128xf32>
    %31 = vector.extract_strided_slice %30 {offsets = [0, 0], sizes = [8, 1], strides = [1, 1]} : vector<8x128xf32> to vector<8x1xf32>
    %32 = arith.mulf %25, %25 : vector<8x1xf32>
    %33 = arith.mulf %28, %31 : vector<8x1xf32>
    %cst_9 = arith.constant 9.99999997E-7 : f32
    %34 = vector.broadcast %cst_9 : f32 to vector<8x1xf32>
    %35 = arith.addf %33, %34 : vector<8x1xf32>
    %36 = arith.divf %32, %35 : vector<8x1xf32>
    %cst_10 = arith.constant 1.000000e+00 : f32
    %37 = vector.broadcast %cst_10 : f32 to vector<8x1xf32>
    %38 = arith.subf %37, %36 : vector<8x1xf32>
    %cst_11 = arith.constant 5.000000e-01 : f32
    %39 = vector.broadcast %cst_11 : f32 to vector<8x1xf32>
    %40 = arith.cmpf ogt, %5, %39 : vector<8x1xf32>
    %cst_12 = arith.constant 0.000000e+00 : f32
    %41 = vector.broadcast %cst_12 : f32 to vector<8x1xf32>
    %42 = arith.select %40, %38, %41 : vector<8x1xi1>, vector<8x1xf32>
    %cst_13 = arith.constant dense<0.000000e+00> : vector<1xf32>
    %43 = vector.multi_reduction <add>, %42, %cst_13 [0] : vector<8x1xf32> to vector<1xf32>
    %44 = vector.shape_cast %43 : vector<1xf32> to vector<1x1xf32>
    %cst_14 = arith.constant dense<0.000000e+00> : vector<1xf32>
    %45 = vector.multi_reduction <add>, %5, %cst_14 [0] : vector<8x1xf32> to vector<1xf32>
    %46 = vector.shape_cast %45 : vector<1xf32> to vector<1x1xf32>
    %47 = vector.shape_cast %44 : vector<1x1xf32> to vector<1x1xf32>
    %48 = vector.broadcast %47 : vector<1x1xf32> to vector<1x128xf32>
    %c0_15 = arith.constant 0 : index
    %c0_16 = arith.constant 0 : index
    %49 = vector.load %arg5[%c0_15, %c0_16] : memref<1x128xf32, #tpu.memory_space<vmem>>, vector<1x128xf32>
    tpu.vector_store %arg5[%c0_15, %c0_16], %48 {strides = array<i32>} : memref<1x128xf32, #tpu.memory_space<vmem>>, vector<1x128xf32>,
    %50 = vector.shape_cast %46 : vector<1x1xf32> to vector<1x1xf32>
    %51 = vector.broadcast %50 : vector<1x1xf32> to vector<1x128xf32>
    %c0_17 = arith.constant 0 : index
    %c0_18 = arith.constant 0 : index
    %52 = vector.load %arg6[%c0_17, %c0_18] : memref<1x128xf32, #tpu.memory_space<vmem>>, vector<1x128xf32>
    tpu.vector_store %arg6[%c0_17, %c0_18], %51 {strides = array<i32>} : memref<1x128xf32, #tpu.memory_space<vmem>>, vector<1x128xf32>,
    return
  }
  func.func @transform_0(%arg0: i32) -> (i32, i32) {
    %c0_i32 = arith.constant 0 : i32
    %c0_i32_0 = arith.constant 0 : i32
    return %arg0, %c0_i32 : i32, i32
  }
  func.func @transform_1(%arg0: i32) -> (i32, i32) {
    %c0_i32 = arith.constant 0 : i32
    %c0_i32_0 = arith.constant 0 : i32
    return %arg0, %c0_i32 : i32, i32
  }
  func.func @transform_2(%arg0: i32) -> (i32, i32) {
    %c0_i32 = arith.constant 0 : i32
    %c0_i32_0 = arith.constant 0 : i32
    %c0_i32_1 = arith.constant 0 : i32
    return %c0_i32, %c0_i32_0 : i32, i32
  }
  func.func @transform_3(%arg0: i32) -> (i32, i32) {
    %c0_i32 = arith.constant 0 : i32
    %c0_i32_0 = arith.constant 0 : i32
    %c0_i32_1 = arith.constant 0 : i32
    return %c0_i32, %c0_i32_0 : i32, i32
  }
  func.func @transform_4(%arg0: i32) -> (i32, i32) {
    %c0_i32 = arith.constant 0 : i32
    %c0_i32_0 = arith.constant 0 : i32
    return %c0_i32, %arg0 : i32, i32
  }
  func.func @transform_5(%arg0: i32) -> (i32, i32) {
    %c0_i32 = arith.constant 0 : i32
    %c0_i32_0 = arith.constant 0 : i32
    return %c0_i32, %arg0 : i32, i32
  }
}

</mosaic_0001>

<llo_original>
// kernel: tpu_custom_call.1
$region0: #{tpu_custom_call.1}
  #allocation0 [shape = 'u32[]', space=smem, size = 0x4, offset = 0x4, fixed_abs, tag = 'smem constant byte address 0x4 - core index']
  #allocation1 [shape = 'u32[144,128]{1,0:T(1,128)}', space=vmem, size = 0x12000, scoped, tag = 'internal scratch']
  %s0 = inlined_call_operand.hbm [shape: f32[8,256], index: 0, kind: input, shape index: {}]
  %s1 = inlined_call_operand.hbm [shape: f32[8,8], index: 1, kind: input, shape index: {}]
  %s2 = inlined_call_operand.hbm [shape: f32[8,256], index: 2, kind: input, shape index: {}]
  %s3 = inlined_call_operand.hbm [shape: f32[256,128], index: 3, kind: input, shape index: {}]
  %s4 = inlined_call_operand.hbm [shape: f32[1,128], index: 4, kind: output, shape index: {0}]
  %s5 = inlined_call_operand.hbm [shape: f32[1,128], index: 5, kind: output, shape index: {1}]
  %6 = xla_tuple %s4, %s5
  %s7 = sld [smem:[#allocation0]]
  $region50: #{tpu_custom_call.1} parent=0
    _
  %s9 = ssub.s32 1, %s7
  %s10 = scalar_select 0, %s9, %s7
  $region1: #{tpu_custom_call.1} parent=0
    #allocation2 [shape = 'u8[8192]{0}', space=vmem, size = 0x2000, scoped, tag = 'input window, operand 0, single buffered']
    #allocation3 [shape = 's32[1]{0}', space=sflag, size = 0x4, scoped, tag = 'scoped memory for tpu_custom_call.1']
    #allocation4 [shape = 's32[1]{0}', space=sflag, size = 0x4, scoped, tag = 'scoped memory for tpu_custom_call.1']
    #allocation5 [shape = 'u8[4096]{0}', space=vmem, size = 0x1000, scoped, tag = 'input window, operand 1, single buffered']
    #allocation6 [shape = 's32[1]{0}', space=sflag, size = 0x4, scoped, tag = 'scoped memory for tpu_custom_call.1']
    #allocation7 [shape = 'u8[8192]{0}', space=vmem, size = 0x2000, scoped, tag = 'input window, operand 2, single buffered']
    #allocation8 [shape = 'u8[131072]{0}', space=vmem, size = 0x20000, scoped, tag = 'input window, operand 3, single buffered']
    #allocation9 [shape = 's32[1]{0}', space=sflag, size = 0x4, scoped, tag = 'scoped memory for tpu_custom_call.1']
    #allocation10 [shape = 'u8[512]{0}', space=vmem, size = 0x400, scoped, tag = 'output window, operand 0, single buffered']
    #allocation11 [shape = 'u8[512]{0}', space=vmem, size = 0x400, scoped, tag = 'output window, operand 1, single buffered']
    #allocation12 [shape = 's32[1]{0}', space=sflag, size = 0x4, scoped, tag = 'scoped memory for tpu_custom_call.1']
    %11 = vsyncpa [#allocation3], 0
    %12 = vsyncpa [#allocation6], 0
    %13 = vsyncpa [#allocation9], 0
    %14 = vsyncpa [#allocation4], 0
    %15 = vsyncpa [#allocation12], 0
    // Predicated region
    $region2: #{tpu_custom_call.1} parent=1 // pred_check
      _
    $region3: #{tpu_custom_call.1} parent=1 // pred_check_branch
      %17 = sbr.rel (0) target = $region5
    $region4: #{tpu_custom_call.1} parent=1 // pred_region
      %s19 = ssub.s32 256, 256
      %20 = vsyncadd [#allocation3], %s19
      %s22 = sshll.u32 [#allocation2], 4
      %s23 = int_to_ptr.vmem [resolvable:$true] %s22
      %25 = dma.hbm_to_vmem [thread:$0]  %s0, 256, %s23, [#allocation3]
    $region5: #{tpu_custom_call.1} parent=1 // pred_fallthru
      _
    // Predicated region
    $region6: #{tpu_custom_call.1} parent=1 // pred_check
      _
    $region7: #{tpu_custom_call.1} parent=1 // pred_check_branch
      %27 = sbr.rel (0) target = $region9
    $region8: #{tpu_custom_call.1} parent=1 // pred_region
      %s29 = ssub.s32 128, 128
      %30 = vsyncadd [#allocation6], %s29
      %s32 = sshll.u32 [#allocation5], 4
      %s33 = int_to_ptr.vmem [resolvable:$true] %s32
      %35 = dma.hbm_to_vmem [thread:$0]  %s1, 128, %s33, [#allocation6]
    $region9: #{tpu_custom_call.1} parent=1 // pred_fallthru
      _
    // Predicated region
    $region10: #{tpu_custom_call.1} parent=1 // pred_check
      _
    $region11: #{tpu_custom_call.1} parent=1 // pred_check_branch
      %37 = sbr.rel (0) target = $region13
    $region12: #{tpu_custom_call.1} parent=1 // pred_region
      %s39 = ssub.s32 256, 256
      %40 = vsyncadd [#allocation6], %s39
      %s42 = sshll.u32 [#allocation7], 4
      %s43 = int_to_ptr.vmem [resolvable:$true] %s42
      %45 = dma.hbm_to_vmem [thread:$0]  %s2, 256, %s43, [#allocation6]
    $region13: #{tpu_custom_call.1} parent=1 // pred_fallthru
      _
    // Predicated region
    $region14: #{tpu_custom_call.1} parent=1 // pred_check
      _
    $region15: #{tpu_custom_call.1} parent=1 // pred_check_branch
      %47 = sbr.rel (0) target = $region17
    $region16: #{tpu_custom_call.1} parent=1 // pred_region
      %s49 = ssub.s32 4096, 4096
      %50 = vsyncadd [#allocation9], %s49
      %s51 = sshll.u32 [#allocation8], 4
      %s52 = int_to_ptr.vmem [resolvable:$true] %s51
      %57 = dma.hbm_to_vmem [thread:$0]  %s3, 4096, %s52, [#allocation9], 128, 128, 8
    $region17: #{tpu_custom_call.1} parent=1 // pred_fallthru
      _
    // Predicated region
    $region18: #{tpu_custom_call.1} parent=1 // pred_check
      _
    $region19: #{tpu_custom_call.1} parent=1 // pred_check_branch
      %59 = sbr.rel (0) target = $region21
    $region20: #{tpu_custom_call.1} parent=1 // pred_region
      %60 = dma.done [#allocation3], 256
    $region21: #{tpu_custom_call.1} parent=1 // pred_fallthru
      _
    // Predicated region
    $region22: #{tpu_custom_call.1} parent=1 // pred_check
      _
    $region23: #{tpu_custom_call.1} parent=1 // pred_check_branch
      %62 = sbr.rel (0) target = $region25
    $region24: #{tpu_custom_call.1} parent=1 // pred_region
      %63 = dma.done [#allocation6], 128
    $region25: #{tpu_custom_call.1} parent=1 // pred_fallthru
      _
    // Predicated region
    $region26: #{tpu_custom_call.1} parent=1 // pred_check
      _
    $region27: #{tpu_custom_call.1} parent=1 // pred_check_branch
      %65 = sbr.rel (0) target = $region29
    $region28: #{tpu_custom_call.1} parent=1 // pred_region
      %66 = dma.done [#allocation6], 256
    $region29: #{tpu_custom_call.1} parent=1 // pred_fallthru
      _
    // Predicated region
    $region30: #{tpu_custom_call.1} parent=1 // pred_check
      _
    $region31: #{tpu_custom_call.1} parent=1 // pred_check_branch
      %68 = sbr.rel (0) target = $region33
    $region32: #{tpu_custom_call.1} parent=1 // pred_region
      %69 = dma.done [#allocation9], 4096
    $region33: #{tpu_custom_call.1} parent=1 // pred_fallthru
      _
    %v70 = vld [vmem:[#allocation2] sm:$0xff]
    %v71 = vld [vmem:[#allocation2 + $0x8] sm:$0xff]
    %v72 = vld [vmem:[#allocation5] sm:$0xff]
    %v73 = vld [vmem:[#allocation7] sm:$0xff]
    %v74 = vld [vmem:[#allocation7 + $0x8] sm:$0xff]
    %76 = vset.pattern.permute.xlu0 0
    %77 = vperm.xlu0 %76, %v72
    %v78 = vpop.permute.xlu0 %77
    %v80 = vlaneseq
    %v81 = vshrl.u32 %v80, 7
    %v82 = vsub.s32 0, %v81
    %v83 = vrot.slane %v73, %v82
    %v84 = vlaneseq
    %v85 = vshrl.u32 %v84, 7
    %v86 = vsub.s32 0, %v85
    %v87 = vrot.slane %v74, %v86
    %v88 = vmul.f32 %v78, %v83
    %v89 = vmul.f32 %v78, %v87
    %90 = vset.pattern.permute.xlu0 1
    %91 = vperm.xlu0 %90, %v72
    %v92 = vpop.permute.xlu0 %91
    %v94 = vlaneseq
    %v95 = vshrl.u32 %v94, 7
    %v96 = vsub.s32 1, %v95
    %v97 = vrot.slane %v73, %v96
    %v98 = vlaneseq
    %v99 = vshrl.u32 %v98, 7
    %v100 = vsub.s32 1, %v99
    %v101 = vrot.slane %v74, %v100
    %v102 = vmul.f32 %v92, %v97
    %v103 = vmul.f32 %v92, %v101
    %v104 = vadd.f32 %v88, %v102
    %v105 = vadd.f32 %v89, %v103
    %v106 = vlaneseq
    %v107 = vshrl.u32 %v106, 7
    %v108 = vsub.s32 2, %v107
    %v109 = vrot.slane %v73, %v108
    %v110 = vlaneseq
    %v111 = vshrl.u32 %v110, 7
    %v112 = vsub.s32 2, %v111
    %v113 = vrot.slane %v74, %v112
    %v114 = vadd.f32 %v104, %v109
    %v115 = vadd.f32 %v105, %v113
    %116 = vset.pattern.permute.xlu0 2
    %117 = vperm.xlu0 %116, %v72
    %v118 = vpop.permute.xlu0 %117
    %v120 = vadd.f32 %v114, %v118
    %v121 = vadd.f32 %v115, %v118
    %v122 = vmul.f32 %v120, 1.442695
    %v123 = vpow.pop %v122
    %v124 = vmul.f32 %v121, 1.442695
    %v125 = vpow.pop %v124
    %v126 = vld [vmem:[#allocation8] sm:$0xff]
    %v127 = vld [vmem:[#allocation8 + $0x8] sm:$0xff]
    %v128 = vld [vmem:[#allocation8 + $0x10] sm:$0xff]
    %v129 = vld [vmem:[#allocation8 + $0x18] sm:$0xff]
    %v130 = vld [vmem:[#allocation8 + $0x20] sm:$0xff]
    %v131 = vld [vmem:[#allocation8 + $0x28] sm:$0xff]
    %v132 = vld [vmem:[#allocation8 + $0x30] sm:$0xff]
    %v133 = vld [vmem:[#allocation8 + $0x38] sm:$0xff]
    %v134 = vld [vmem:[#allocation8 + $0x40] sm:$0xff]
    %v135 = vld [vmem:[#allocation8 + $0x48] sm:$0xff]
    %v136 = vld [vmem:[#allocation8 + $0x50] sm:$0xff]
    %v137 = vld [vmem:[#allocation8 + $0x58] sm:$0xff]
    %v138 = vld [vmem:[#allocation8 + $0x60] sm:$0xff]
    %v139 = vld [vmem:[#allocation8 + $0x68] sm:$0xff]
    %v140 = vld [vmem:[#allocation8 + $0x70] sm:$0xff]
    %v141 = vld [vmem:[#allocation8 + $0x78] sm:$0xff]
    %v142 = vld [vmem:[#allocation8 + $0x80] sm:$0xff]
    %v143 = vld [vmem:[#allocation8 + $0x88] sm:$0xff]
    %v144 = vld [vmem:[#allocation8 + $0x90] sm:$0xff]
    %v145 = vld [vmem:[#allocation8 + $0x98] sm:$0xff]
    %v146 = vld [vmem:[#allocation8 + $0xa0] sm:$0xff]
    %v147 = vld [vmem:[#allocation8 + $0xa8] sm:$0xff]
    %v148 = vld [vmem:[#allocation8 + $0xb0] sm:$0xff]
    %v149 = vld [vmem:[#allocation8 + $0xb8] sm:$0xff]
    %v150 = vld [vmem:[#allocation8 + $0xc0] sm:$0xff]
    %v151 = vld [vmem:[#allocation8 + $0xc8] sm:$0xff]
    %v152 = vld [vmem:[#allocation8 + $0xd0] sm:$0xff]
    %v153 = vld [vmem:[#allocation8 + $0xd8] sm:$0xff]
    %v154 = vld [vmem:[#allocation8 + $0xe0] sm:$0xff]
    %v155 = vld [vmem:[#allocation8 + $0xe8] sm:$0xff]
    %v156 = vld [vmem:[#allocation8 + $0xf0] sm:$0xff]
    %v157 = vld [vmem:[#allocation8 + $0xf8] sm:$0xff]
    %v158 = vmul.f32 %v123, %v70
    %v159 = vmul.f32 %v125, %v71
    %160 = vmatprep.subr.mxu0 0.0
    %v161 = vand.u32 %v126, 4294901760
    %162 = vmatpush1.msra.mxu0 %v161
    %163 = vmatprep.subr.mxu0 0.0
    %v164 = vand.u32 %v127, 4294901760
    %165 = vmatpush1.msra.mxu0 %v164
    %166 = vmatprep.subr.mxu0 0.0
    %v167 = vand.u32 %v128, 4294901760
    %168 = vmatpush1.msra.mxu0 %v167
    %169 = vmatprep.subr.mxu0 0.0
    %v170 = vand.u32 %v129, 4294901760
    %171 = vmatpush1.msra.mxu0 %v170
    %172 = vmatprep.subr.mxu0 0.0
    %v173 = vand.u32 %v130, 4294901760
    %174 = vmatpush1.msra.mxu0 %v173
    %175 = vmatprep.subr.mxu0 0.0
    %v176 = vand.u32 %v131, 4294901760
    %177 = vmatpush1.msra.mxu0 %v176
    %178 = vmatprep.subr.mxu0 0.0
    %v179 = vand.u32 %v132, 4294901760
    %180 = vmatpush1.msra.mxu0 %v179
    %181 = vmatprep.subr.mxu0 0.0
    %v182 = vand.u32 %v133, 4294901760
    %183 = vmatpush1.msra.mxu0 %v182
    %184 = vmatprep.subr.mxu0 0.0
    %v185 = vand.u32 %v134, 4294901760
    %186 = vmatpush1.msra.mxu0 %v185
    %187 = vmatprep.subr.mxu0 0.0
    %v188 = vand.u32 %v135, 4294901760
    %189 = vmatpush1.msra.mxu0 %v188
    %190 = vmatprep.subr.mxu0 0.0
    %v191 = vand.u32 %v136, 4294901760
    %192 = vmatpush1.msra.mxu0 %v191
    %193 = vmatprep.subr.mxu0 0.0
    %v194 = vand.u32 %v137, 4294901760
    %195 = vmatpush1.msra.mxu0 %v194
    %196 = vmatprep.subr.mxu0 0.0
    %v197 = vand.u32 %v138, 4294901760
    %198 = vmatpush1.msra.mxu0 %v197
    %199 = vmatprep.subr.mxu0 0.0
    %v200 = vand.u32 %v139, 4294901760
    %201 = vmatpush1.msra.mxu0 %v200
    %202 = vmatprep.subr.mxu0 0.0
    %v203 = vand.u32 %v140, 4294901760
    %204 = vmatpush1.msra.mxu0 %v203
    %205 = vmatprep.subr.mxu0 0.0
    %v206 = vand.u32 %v141, 4294901760
    %207 = vmatpush1.msra.mxu0 %v206
    %208 = vmatprep.subr.mxu0 0.0
    %v209 = vand.u32 %v142, 4294901760
    %210 = vmatpush1.msra.mxu0 %v209
    %211 = vmatprep.subr.mxu0 0.0
    %v212 = vand.u32 %v143, 4294901760
    %213 = vmatpush1.msra.mxu0 %v212
    %214 = vmatprep.subr.mxu0 0.0
    %v215 = vand.u32 %v144, 4294901760
    %216 = vmatpush1.msra.mxu0 %v215
    %217 = vmatprep.subr.mxu0 0.0
    %v218 = vand.u32 %v145, 4294901760
    %219 = vmatpush1.msra.mxu0 %v218
    %220 = vmatprep.subr.mxu0 0.0
    %v221 = vand.u32 %v146, 4294901760
    %222 = vmatpush1.msra.mxu0 %v221
    %223 = vmatprep.subr.mxu0 0.0
    %v224 = vand.u32 %v147, 4294901760
    %225 = vmatpush1.msra.mxu0 %v224
    %226 = vmatprep.subr.mxu0 0.0
    %v227 = vand.u32 %v148, 4294901760
    %228 = vmatpush1.msra.mxu0 %v227
    %229 = vmatprep.subr.mxu0 0.0
    %v230 = vand.u32 %v149, 4294901760
    %231 = vmatpush1.msra.mxu0 %v230
    %232 = vmatprep.subr.mxu0 0.0
    %v233 = vand.u32 %v150, 4294901760
    %234 = vmatpush1.msra.mxu0 %v233
    %235 = vmatprep.subr.mxu0 0.0
    %v236 = vand.u32 %v151, 4294901760
    %237 = vmatpush1.msra.mxu0 %v236
    %238 = vmatprep.subr.mxu0 0.0
    %v239 = vand.u32 %v152, 4294901760
    %240 = vmatpush1.msra.mxu0 %v239
    %241 = vmatprep.subr.mxu0 0.0
    %v242 = vand.u32 %v153, 4294901760
    %243 = vmatpush1.msra.mxu0 %v242
    %244 = vmatprep.subr.mxu0 0.0
    %v245 = vand.u32 %v154, 4294901760
    %246 = vmatpush1.msra.mxu0 %v245
    %247 = vmatprep.subr.mxu0 0.0
    %v248 = vand.u32 %v155, 4294901760
    %249 = vmatpush1.msra.mxu0 %v248
    %250 = vmatprep.subr.mxu0 0.0
    %v251 = vand.u32 %v156, 4294901760
    %252 = vmatpush1.msra.mxu0 %v251
    %253 = vmatprep.subr.mxu0 0.0
    %v254 = vand.u32 %v157, 4294901760
    %255 = vmatpush1.msra.mxu0 %v254
    %v256 = vand.u32 %v159, 4294901760
    %v257 = vsub.f32 %v159, %v256
    %v258 = vand.u32 %v257, 4294901760
    %v259 = vsub.f32 %v257, %v258
    %v260 = vand.u32 %v259, 4294901760
    %261 = vmatprep.mubr.f32.mxu0 %v260
    %v262 = vand.u32 %v158, 4294901760
    %v263 = vsub.f32 %v158, %v262
    %v264 = vand.u32 %v263, 4294901760
    %v265 = vsub.f32 %v263, %v264
    %v266 = vand.u32 %v265, 4294901760
    %267 = vmatmul.mubr.f32.gmra.mrb[0].mxu0 %v266
    %v268 = vpop.f32.mrb[0].mxu0
    %v269 = vadd.f32 0.0, %v268
    %v270 = vpop.f32.mrb[0].mxu0
    %271 = vdwg.mxu0
    %272 = vmatprep.subr.mxu0 0.0
    %v273 = vand.u32 %v126, 4294901760
    %v274 = vsub.f32 %v126, %v273
    %v275 = vand.u32 %v274, 4294901760
    %v276 = vsub.f32 %v274, %v275
    %v277 = vand.u32 %v276, 4294901760
    %278 = vmatpush1.msra.mxu0 %v277
    %279 = vmatprep.subr.mxu0 0.0
    %v280 = vand.u32 %v127, 4294901760
    %v281 = vsub.f32 %v127, %v280
    %v282 = vand.u32 %v281, 4294901760
    %v283 = vsub.f32 %v281, %v282
    %v284 = vand.u32 %v283, 4294901760
    %285 = vmatpush1.msra.mxu0 %v284
    %286 = vmatprep.subr.mxu0 0.0
    %v287 = vand.u32 %v128, 4294901760
    %v288 = vsub.f32 %v128, %v287
    %v289 = vand.u32 %v288, 4294901760
    %v290 = vsub.f32 %v288, %v289
    %v291 = vand.u32 %v290, 4294901760
    %292 = vmatpush1.msra.mxu0 %v291
    %293 = vmatprep.subr.mxu0 0.0
    %v294 = vand.u32 %v129, 4294901760
    %v295 = vsub.f32 %v129, %v294
    %v296 = vand.u32 %v295, 4294901760
    %v297 = vsub.f32 %v295, %v296
    %v298 = vand.u32 %v297, 4294901760
    %299 = vmatpush1.msra.mxu0 %v298
    %300 = vmatprep.subr.mxu0 0.0
    %v301 = vand.u32 %v130, 4294901760
    %v302 = vsub.f32 %v130, %v301
    %v303 = vand.u32 %v302, 4294901760
    %v304 = vsub.f32 %v302, %v303
    %v305 = vand.u32 %v304, 4294901760
    %306 = vmatpush1.msra.mxu0 %v305
    %307 = vmatprep.subr.mxu0 0.0
    %v308 = vand.u32 %v131, 4294901760
    %v309 = vsub.f32 %v131, %v308
    %v310 = vand.u32 %v309, 4294901760
    %v311 = vsub.f32 %v309, %v310
    %v312 = vand.u32 %v311, 4294901760
    %313 = vmatpush1.msra.mxu0 %v312
    %314 = vmatprep.subr.mxu0 0.0
    %v315 = vand.u32 %v132, 4294901760
    %v316 = vsub.f32 %v132, %v315
    %v317 = vand.u32 %v316, 4294901760
    %v318 = vsub.f32 %v316, %v317
    %v319 = vand.u32 %v318, 4294901760
    %320 = vmatpush1.msra.mxu0 %v319
    %321 = vmatprep.subr.mxu0 0.0
    %v322 = vand.u32 %v133, 4294901760
    %v323 = vsub.f32 %v133, %v322
    %v324 = vand.u32 %v323, 4294901760
    %v325 = vsub.f32 %v323, %v324
    %v326 = vand.u32 %v325, 4294901760
    %327 = vmatpush1.msra.mxu0 %v326
    %328 = vmatprep.subr.mxu0 0.0
    %v329 = vand.u32 %v134, 4294901760
    %v330 = vsub.f32 %v134, %v329
    %v331 = vand.u32 %v330, 4294901760
    %v332 = vsub.f32 %v330, %v331
    %v333 = vand.u32 %v332, 4294901760
    %334 = vmatpush1.msra.mxu0 %v333
    %335 = vmatprep.subr.mxu0 0.0
    %v336 = vand.u32 %v135, 4294901760
    %v337 = vsub.f32 %v135, %v336
    %v338 = vand.u32 %v337, 4294901760
    %v339 = vsub.f32 %v337, %v338
    %v340 = vand.u32 %v339, 4294901760
    %341 = vmatpush1.msra.mxu0 %v340
    %342 = vmatprep.subr.mxu0 0.0
    %v343 = vand.u32 %v136, 4294901760
    %v344 = vsub.f32 %v136, %v343
    %v345 = vand.u32 %v344, 4294901760
    %v346 = vsub.f32 %v344, %v345
    %v347 = vand.u32 %v346, 4294901760
    %348 = vmatpush1.msra.mxu0 %v347
    %349 = vmatprep.subr.mxu0 0.0
    %v350 = vand.u32 %v137, 4294901760
    %v351 = vsub.f32 %v137, %v350
    %v352 = vand.u32 %v351, 4294901760
    %v353 = vsub.f32 %v351, %v352
    %v354 = vand.u32 %v353, 4294901760
    %355 = vmatpush1.msra.mxu0 %v354
    %356 = vmatprep.subr.mxu0 0.0
    %v357 = vand.u32 %v138, 4294901760
    %v358 = vsub.f32 %v138, %v357
    %v359 = vand.u32 %v358, 4294901760
    %v360 = vsub.f32 %v358, %v359
    %v361 = vand.u32 %v360, 4294901760
    %362 = vmatpush1.msra.mxu0 %v361
    %363 = vmatprep.subr.mxu0 0.0
    %v364 = vand.u32 %v139, 4294901760
    %v365 = vsub.f32 %v139, %v364
    %v366 = vand.u32 %v365, 4294901760
    %v367 = vsub.f32 %v365, %v366
    %v368 = vand.u32 %v367, 4294901760
    %369 = vmatpush1.msra.mxu0 %v368
    %370 = vmatprep.subr.mxu0 0.0
    %v371 = vand.u32 %v140, 4294901760
    %v372 = vsub.f32 %v140, %v371
    %v373 = vand.u32 %v372, 4294901760
    %v374 = vsub.f32 %v372, %v373
    %v375 = vand.u32 %v374, 4294901760
    %376 = vmatpush1.msra.mxu0 %v375
    %377 = vmatprep.subr.mxu0 0.0
    %v378 = vand.u32 %v141, 4294901760
    %v379 = vsub.f32 %v141, %v378
    %v380 = vand.u32 %v379, 4294901760
    %v381 = vsub.f32 %v379, %v380
    %v382 = vand.u32 %v381, 4294901760
    %383 = vmatpush1.msra.mxu0 %v382
    %384 = vmatprep.subr.mxu0 0.0
    %v385 = vand.u32 %v142, 4294901760
    %v386 = vsub.f32 %v142, %v385
    %v387 = vand.u32 %v386, 4294901760
    %v388 = vsub.f32 %v386, %v387
    %v389 = vand.u32 %v388, 4294901760
    %390 = vmatpush1.msra.mxu0 %v389
    %391 = vmatprep.subr.mxu0 0.0
    %v392 = vand.u32 %v143, 4294901760
    %v393 = vsub.f32 %v143, %v392
    %v394 = vand.u32 %v393, 4294901760
    %v395 = vsub.f32 %v393, %v394
    %v396 = vand.u32 %v395, 4294901760
    %397 = vmatpush1.msra.mxu0 %v396
    %398 = vmatprep.subr.mxu0 0.0
    %v399 = vand.u32 %v144, 4294901760
    %v400 = vsub.f32 %v144, %v399
    %v401 = vand.u32 %v400, 4294901760
    %v402 = vsub.f32 %v400, %v401
    %v403 = vand.u32 %v402, 4294901760
    %404 = vmatpush1.msra.mxu0 %v403
    %405 = vmatprep.subr.mxu0 0.0
    %v406 = vand.u32 %v145, 4294901760
    %v407 = vsub.f32 %v145, %v406
    %v408 = vand.u32 %v407, 4294901760
    %v409 = vsub.f32 %v407, %v408
    %v410 = vand.u32 %v409, 4294901760
    %411 = vmatpush1.msra.mxu0 %v410
    %412 = vmatprep.subr.mxu0 0.0
    %v413 = vand.u32 %v146, 4294901760
    %v414 = vsub.f32 %v146, %v413
    %v415 = vand.u32 %v414, 4294901760
    %v416 = vsub.f32 %v414, %v415
    %v417 = vand.u32 %v416, 4294901760
    %418 = vmatpush1.msra.mxu0 %v417
    %419 = vmatprep.subr.mxu0 0.0
    %v420 = vand.u32 %v147, 4294901760
    %v421 = vsub.f32 %v147, %v420
    %v422 = vand.u32 %v421, 4294901760
    %v423 = vsub.f32 %v421, %v422
    %v424 = vand.u32 %v423, 4294901760
    %425 = vmatpush1.msra.mxu0 %v424
    %426 = vmatprep.subr.mxu0 0.0
    %v427 = vand.u32 %v148, 4294901760
    %v428 = vsub.f32 %v148, %v427
    %v429 = vand.u32 %v428, 4294901760
    %v430 = vsub.f32 %v428, %v429
    %v431 = vand.u32 %v430, 4294901760
    %432 = vmatpush1.msra.mxu0 %v431
    %433 = vmatprep.subr.mxu0 0.0
    %v434 = vand.u32 %v149, 4294901760
    %v435 = vsub.f32 %v149, %v434
    %v436 = vand.u32 %v435, 4294901760
    %v437 = vsub.f32 %v435, %v436
    %v438 = vand.u32 %v437, 4294901760
    %439 = vmatpush1.msra.mxu0 %v438
    %440 = vmatprep.subr.mxu0 0.0
    %v441 = vand.u32 %v150, 4294901760
    %v442 = vsub.f32 %v150, %v441
    %v443 = vand.u32 %v442, 4294901760
    %v444 = vsub.f32 %v442, %v443
    %v445 = vand.u32 %v444, 4294901760
    %446 = vmatpush1.msra.mxu0 %v445
    %447 = vmatprep.subr.mxu0 0.0
    %v448 = vand.u32 %v151, 4294901760
    %v449 = vsub.f32 %v151, %v448
    %v450 = vand.u32 %v449, 4294901760
    %v451 = vsub.f32 %v449, %v450
    %v452 = vand.u32 %v451, 4294901760
    %453 = vmatpush1.msra.mxu0 %v452
    %454 = vmatprep.subr.mxu0 0.0
    %v455 = vand.u32 %v152, 4294901760
    %v456 = vsub.f32 %v152, %v455
    %v457 = vand.u32 %v456, 4294901760
    %v458 = vsub.f32 %v456, %v457
    %v459 = vand.u32 %v458, 4294901760
    %460 = vmatpush1.msra.mxu0 %v459
    %461 = vmatprep.subr.mxu0 0.0
    %v462 = vand.u32 %v153, 4294901760
    %v463 = vsub.f32 %v153, %v462
    %v464 = vand.u32 %v463, 4294901760
    %v465 = vsub.f32 %v463, %v464
    %v466 = vand.u32 %v465, 4294901760
    %467 = vmatpush1.msra.mxu0 %v466
    %468 = vmatprep.subr.mxu0 0.0
    %v469 = vand.u32 %v154, 4294901760
    %v470 = vsub.f32 %v154, %v469
    %v471 = vand.u32 %v470, 4294901760
    %v472 = vsub.f32 %v470, %v471
    %v473 = vand.u32 %v472, 4294901760
    %474 = vmatpush1.msra.mxu0 %v473
    %475 = vmatprep.subr.mxu0 0.0
    %v476 = vand.u32 %v155, 4294901760
    %v477 = vsub.f32 %v155, %v476
    %v478 = vand.u32 %v477, 4294901760
    %v479 = vsub.f32 %v477, %v478
    %v480 = vand.u32 %v479, 4294901760
    %481 = vmatpush1.msra.mxu0 %v480
    %482 = vmatprep.subr.mxu0 0.0
    %v483 = vand.u32 %v156, 4294901760
    %v484 = vsub.f32 %v156, %v483
    %v485 = vand.u32 %v484, 4294901760
    %v486 = vsub.f32 %v484, %v485
    %v487 = vand.u32 %v486, 4294901760
    %488 = vmatpush1.msra.mxu0 %v487
    %489 = vmatprep.subr.mxu0 0.0
    %v490 = vand.u32 %v157, 4294901760
    %v491 = vsub.f32 %v157, %v490
    %v492 = vand.u32 %v491, 4294901760
    %v493 = vsub.f32 %v491, %v492
    %v494 = vand.u32 %v493, 4294901760
    %495 = vmatpush1.msra.mxu0 %v494
    %v496 = vand.u32 %v159, 4294901760
    %497 = vmatprep.mubr.f32.mxu0 %v496
    %v498 = vand.u32 %v158, 4294901760
    %499 = vmatmul.mubr.f32.gmra.mrb[0].mxu0 %v498
    %v500 = vpop.f32.mrb[0].mxu0
    %v501 = vadd.f32 %v269, %v500
    %v502 = vpop.f32.mrb[0].mxu0
    %503 = vdwg.mxu0
    %504 = vmatprep.subr.mxu0 0.0
    %v505 = vand.u32 %v126, 4294901760
    %v506 = vsub.f32 %v126, %v505
    %507 = vmatpush1.msra.mxu0 %v506
    %508 = vmatprep.subr.mxu0 0.0
    %v509 = vand.u32 %v127, 4294901760
    %v510 = vsub.f32 %v127, %v509
    %511 = vmatpush1.msra.mxu0 %v510
    %512 = vmatprep.subr.mxu0 0.0
    %v513 = vand.u32 %v128, 4294901760
    %v514 = vsub.f32 %v128, %v513
    %515 = vmatpush1.msra.mxu0 %v514
    %516 = vmatprep.subr.mxu0 0.0
    %v517 = vand.u32 %v129, 4294901760
    %v518 = vsub.f32 %v129, %v517
    %519 = vmatpush1.msra.mxu0 %v518
    %520 = vmatprep.subr.mxu0 0.0
    %v521 = vand.u32 %v130, 4294901760
    %v522 = vsub.f32 %v130, %v521
    %523 = vmatpush1.msra.mxu0 %v522
    %524 = vmatprep.subr.mxu0 0.0
    %v525 = vand.u32 %v131, 4294901760
    %v526 = vsub.f32 %v131, %v525
    %527 = vmatpush1.msra.mxu0 %v526
    %528 = vmatprep.subr.mxu0 0.0
    %v529 = vand.u32 %v132, 4294901760
    %v530 = vsub.f32 %v132, %v529
    %531 = vmatpush1.msra.mxu0 %v530
    %532 = vmatprep.subr.mxu0 0.0
    %v533 = vand.u32 %v133, 4294901760
    %v534 = vsub.f32 %v133, %v533
    %535 = vmatpush1.msra.mxu0 %v534
    %536 = vmatprep.subr.mxu0 0.0
    %v537 = vand.u32 %v134, 4294901760
    %v538 = vsub.f32 %v134, %v537
    %539 = vmatpush1.msra.mxu0 %v538
    %540 = vmatprep.subr.mxu0 0.0
    %v541 = vand.u32 %v135, 4294901760
    %v542 = vsub.f32 %v135, %v541
    %543 = vmatpush1.msra.mxu0 %v542
    %544 = vmatprep.subr.mxu0 0.0
    %v545 = vand.u32 %v136, 4294901760
    %v546 = vsub.f32 %v136, %v545
    %547 = vmatpush1.msra.mxu0 %v546
    %548 = vmatprep.subr.mxu0 0.0
    %v549 = vand.u32 %v137, 4294901760
    %v550 = vsub.f32 %v137, %v549
    %551 = vmatpush1.msra.mxu0 %v550
    %552 = vmatprep.subr.mxu0 0.0
    %v553 = vand.u32 %v138, 4294901760
    %v554 = vsub.f32 %v138, %v553
    %555 = vmatpush1.msra.mxu0 %v554
    %556 = vmatprep.subr.mxu0 0.0
    %v557 = vand.u32 %v139, 4294901760
    %v558 = vsub.f32 %v139, %v557
    %559 = vmatpush1.msra.mxu0 %v558
    %560 = vmatprep.subr.mxu0 0.0
    %v561 = vand.u32 %v140, 4294901760
    %v562 = vsub.f32 %v140, %v561
    %563 = vmatpush1.msra.mxu0 %v562
    %564 = vmatprep.subr.mxu0 0.0
    %v565 = vand.u32 %v141, 4294901760
    %v566 = vsub.f32 %v141, %v565
    %567 = vmatpush1.msra.mxu0 %v566
    %568 = vmatprep.subr.mxu0 0.0
    %v569 = vand.u32 %v142, 4294901760
    %v570 = vsub.f32 %v142, %v569
    %571 = vmatpush1.msra.mxu0 %v570
    %572 = vmatprep.subr.mxu0 0.0
    %v573 = vand.u32 %v143, 4294901760
    %v574 = vsub.f32 %v143, %v573
    %575 = vmatpush1.msra.mxu0 %v574
    %576 = vmatprep.subr.mxu0 0.0
    %v577 = vand.u32 %v144, 4294901760
    %v578 = vsub.f32 %v144, %v577
    %579 = vmatpush1.msra.mxu0 %v578
    %580 = vmatprep.subr.mxu0 0.0
    %v581 = vand.u32 %v145, 4294901760
    %v582 = vsub.f32 %v145, %v581
    %583 = vmatpush1.msra.mxu0 %v582
    %584 = vmatprep.subr.mxu0 0.0
    %v585 = vand.u32 %v146, 4294901760
    %v586 = vsub.f32 %v146, %v585
    %587 = vmatpush1.msra.mxu0 %v586
    %588 = vmatprep.subr.mxu0 0.0
    %v589 = vand.u32 %v147, 4294901760
    %v590 = vsub.f32 %v147, %v589
    %591 = vmatpush1.msra.mxu0 %v590
    %592 = vmatprep.subr.mxu0 0.0
    %v593 = vand.u32 %v148, 4294901760
    %v594 = vsub.f32 %v148, %v593
    %595 = vmatpush1.msra.mxu0 %v594
    %596 = vmatprep.subr.mxu0 0.0
    %v597 = vand.u32 %v149, 4294901760
    %v598 = vsub.f32 %v149, %v597
    %599 = vmatpush1.msra.mxu0 %v598
    %600 = vmatprep.subr.mxu0 0.0
    %v601 = vand.u32 %v150, 4294901760
    %v602 = vsub.f32 %v150, %v601
    %603 = vmatpush1.msra.mxu0 %v602
    %604 = vmatprep.subr.mxu0 0.0
    %v605 = vand.u32 %v151, 4294901760
    %v606 = vsub.f32 %v151, %v605
    %607 = vmatpush1.msra.mxu0 %v606
    %608 = vmatprep.subr.mxu0 0.0
    %v609 = vand.u32 %v152, 4294901760
    %v610 = vsub.f32 %v152, %v609
    %611 = vmatpush1.msra.mxu0 %v610
    %612 = vmatprep.subr.mxu0 0.0
    %v613 = vand.u32 %v153, 4294901760
    %v614 = vsub.f32 %v153, %v613
    %615 = vmatpush1.msra.mxu0 %v614
    %616 = vmatprep.subr.mxu0 0.0
    %v617 = vand.u32 %v154, 4294901760
    %v618 = vsub.f32 %v154, %v617
    %619 = vmatpush1.msra.mxu0 %v618
    %620 = vmatprep.subr.mxu0 0.0
    %v621 = vand.u32 %v155, 4294901760
    %v622 = vsub.f32 %v155, %v621
    %623 = vmatpush1.msra.mxu0 %v622
    %624 = vmatprep.subr.mxu0 0.0
    %v625 = vand.u32 %v156, 4294901760
    %v626 = vsub.f32 %v156, %v625
    %627 = vmatpush1.msra.mxu0 %v626
    %628 = vmatprep.subr.mxu0 0.0
    %v629 = vand.u32 %v157, 4294901760
    %v630 = vsub.f32 %v157, %v629
    %631 = vmatpush1.msra.mxu0 %v630
    %v632 = vand.u32 %v159, 4294901760
    %v633 = vsub.f32 %v159, %v632
    %634 = vmatprep.mubr.f32.mxu0 %v633
    %v635 = vand.u32 %v158, 4294901760
    %v636 = vsub.f32 %v158, %v635
    %637 = vmatmul.mubr.f32.gmra.mrb[0].mxu0 %v636
    %v638 = vpop.f32.mrb[0].mxu0
    %v639 = vadd.f32 %v501, %v638
    %v640 = vpop.f32.mrb[0].mxu0
    %641 = vdwg.mxu0
    %642 = vmatprep.subr.mxu0 0.0
    %v643 = vand.u32 %v126, 4294901760
    %644 = vmatpush1.msra.mxu0 %v643
    %645 = vmatprep.subr.mxu0 0.0
    %v646 = vand.u32 %v127, 4294901760
    %647 = vmatpush1.msra.mxu0 %v646
    %648 = vmatprep.subr.mxu0 0.0
    %v649 = vand.u32 %v128, 4294901760
    %650 = vmatpush1.msra.mxu0 %v649
    %651 = vmatprep.subr.mxu0 0.0
    %v652 = vand.u32 %v129, 4294901760
    %653 = vmatpush1.msra.mxu0 %v652
    %654 = vmatprep.subr.mxu0 0.0
    %v655 = vand.u32 %v130, 4294901760
    %656 = vmatpush1.msra.mxu0 %v655
    %657 = vmatprep.subr.mxu0 0.0
    %v658 = vand.u32 %v131, 4294901760
    %659 = vmatpush1.msra.mxu0 %v658
    %660 = vmatprep.subr.mxu0 0.0
    %v661 = vand.u32 %v132, 4294901760
    %662 = vmatpush1.msra.mxu0 %v661
    %663 = vmatprep.subr.mxu0 0.0
    %v664 = vand.u32 %v133, 4294901760
    %665 = vmatpush1.msra.mxu0 %v664
    %666 = vmatprep.subr.mxu0 0.0
    %v667 = vand.u32 %v134, 4294901760
    %668 = vmatpush1.msra.mxu0 %v667
    %669 = vmatprep.subr.mxu0 0.0
    %v670 = vand.u32 %v135, 4294901760
    %671 = vmatpush1.msra.mxu0 %v670
    %672 = vmatprep.subr.mxu0 0.0
    %v673 = vand.u32 %v136, 4294901760
    %674 = vmatpush1.msra.mxu0 %v673
    %675 = vmatprep.subr.mxu0 0.0
    %v676 = vand.u32 %v137, 4294901760
    %677 = vmatpush1.msra.mxu0 %v676
    %678 = vmatprep.subr.mxu0 0.0
    %v679 = vand.u32 %v138, 4294901760
    %680 = vmatpush1.msra.mxu0 %v679
    %681 = vmatprep.subr.mxu0 0.0
    %v682 = vand.u32 %v139, 4294901760
    %683 = vmatpush1.msra.mxu0 %v682
    %684 = vmatprep.subr.mxu0 0.0
    %v685 = vand.u32 %v140, 4294901760
    %686 = vmatpush1.msra.mxu0 %v685
    %687 = vmatprep.subr.mxu0 0.0
    %v688 = vand.u32 %v141, 4294901760
    %689 = vmatpush1.msra.mxu0 %v688
    %690 = vmatprep.subr.mxu0 0.0
    %v691 = vand.u32 %v142, 4294901760
    %692 = vmatpush1.msra.mxu0 %v691
    %693 = vmatprep.subr.mxu0 0.0
    %v694 = vand.u32 %v143, 4294901760
    %695 = vmatpush1.msra.mxu0 %v694
    %696 = vmatprep.subr.mxu0 0.0
    %v697 = vand.u32 %v144, 4294901760
    %698 = vmatpush1.msra.mxu0 %v697
    %699 = vmatprep.subr.mxu0 0.0
    %v700 = vand.u32 %v145, 4294901760
    %701 = vmatpush1.msra.mxu0 %v700
    %702 = vmatprep.subr.mxu0 0.0
    %v703 = vand.u32 %v146, 4294901760
    %704 = vmatpush1.msra.mxu0 %v703
    %705 = vmatprep.subr.mxu0 0.0
    %v706 = vand.u32 %v147, 4294901760
    %707 = vmatpush1.msra.mxu0 %v706
    %708 = vmatprep.subr.mxu0 0.0
    %v709 = vand.u32 %v148, 4294901760
    %710 = vmatpush1.msra.mxu0 %v709
    %711 = vmatprep.subr.mxu0 0.0
    %v712 = vand.u32 %v149, 4294901760
    %713 = vmatpush1.msra.mxu0 %v712
    %714 = vmatprep.subr.mxu0 0.0
    %v715 = vand.u32 %v150, 4294901760
    %716 = vmatpush1.msra.mxu0 %v715
    %717 = vmatprep.subr.mxu0 0.0
    %v718 = vand.u32 %v151, 4294901760
    %719 = vmatpush1.msra.mxu0 %v718
    %720 = vmatprep.subr.mxu0 0.0
    %v721 = vand.u32 %v152, 4294901760
    %722 = vmatpush1.msra.mxu0 %v721
    %723 = vmatprep.subr.mxu0 0.0
    %v724 = vand.u32 %v153, 4294901760
    %725 = vmatpush1.msra.mxu0 %v724
    %726 = vmatprep.subr.mxu0 0.0
    %v727 = vand.u32 %v154, 4294901760
    %728 = vmatpush1.msra.mxu0 %v727
    %729 = vmatprep.subr.mxu0 0.0
    %v730 = vand.u32 %v155, 4294901760
    %731 = vmatpush1.msra.mxu0 %v730
    %732 = vmatprep.subr.mxu0 0.0
    %v733 = vand.u32 %v156, 4294901760
    %734 = vmatpush1.msra.mxu0 %v733
    %735 = vmatprep.subr.mxu0 0.0
    %v736 = vand.u32 %v157, 4294901760
    %737 = vmatpush1.msra.mxu0 %v736
    %v738 = vand.u32 %v159, 4294901760
    %v739 = vsub.f32 %v159, %v738
    %v740 = vand.u32 %v739, 4294901760
    %741 = vmatprep.mubr.f32.mxu0 %v740
    %v742 = vand.u32 %v158, 4294901760
    %v743 = vsub.f32 %v158, %v742
    %v744 = vand.u32 %v743, 4294901760
    %745 = vmatmul.mubr.f32.gmra.mrb[0].mxu0 %v744
    %v746 = vpop.f32.mrb[0].mxu0
    %v747 = vadd.f32 %v639, %v746
    %v748 = vpop.f32.mrb[0].mxu0
    %749 = vdwg.mxu0
    %750 = vmatprep.subr.mxu0 0.0
    %v751 = vand.u32 %v126, 4294901760
    %v752 = vsub.f32 %v126, %v751
    %v753 = vand.u32 %v752, 4294901760
    %754 = vmatpush1.msra.mxu0 %v753
    %755 = vmatprep.subr.mxu0 0.0
    %v756 = vand.u32 %v127, 4294901760
    %v757 = vsub.f32 %v127, %v756
    %v758 = vand.u32 %v757, 4294901760
    %759 = vmatpush1.msra.mxu0 %v758
    %760 = vmatprep.subr.mxu0 0.0
    %v761 = vand.u32 %v128, 4294901760
    %v762 = vsub.f32 %v128, %v761
    %v763 = vand.u32 %v762, 4294901760
    %764 = vmatpush1.msra.mxu0 %v763
    %765 = vmatprep.subr.mxu0 0.0
    %v766 = vand.u32 %v129, 4294901760
    %v767 = vsub.f32 %v129, %v766
    %v768 = vand.u32 %v767, 4294901760
    %769 = vmatpush1.msra.mxu0 %v768
    %770 = vmatprep.subr.mxu0 0.0
    %v771 = vand.u32 %v130, 4294901760
    %v772 = vsub.f32 %v130, %v771
    %v773 = vand.u32 %v772, 4294901760
    %774 = vmatpush1.msra.mxu0 %v773
    %775 = vmatprep.subr.mxu0 0.0
    %v776 = vand.u32 %v131, 4294901760
    %v777 = vsub.f32 %v131, %v776
    %v778 = vand.u32 %v777, 4294901760
    %779 = vmatpush1.msra.mxu0 %v778
    %780 = vmatprep.subr.mxu0 0.0
    %v781 = vand.u32 %v132, 4294901760
    %v782 = vsub.f32 %v132, %v781
    %v783 = vand.u32 %v782, 4294901760
    %784 = vmatpush1.msra.mxu0 %v783
    %785 = vmatprep.subr.mxu0 0.0
    %v786 = vand.u32 %v133, 4294901760
    %v787 = vsub.f32 %v133, %v786
    %v788 = vand.u32 %v787, 4294901760
    %789 = vmatpush1.msra.mxu0 %v788
    %790 = vmatprep.subr.mxu0 0.0
    %v791 = vand.u32 %v134, 4294901760
    %v792 = vsub.f32 %v134, %v791
    %v793 = vand.u32 %v792, 4294901760
    %794 = vmatpush1.msra.mxu0 %v793
    %795 = vmatprep.subr.mxu0 0.0
    %v796 = vand.u32 %v135, 4294901760
    %v797 = vsub.f32 %v135, %v796
    %v798 = vand.u32 %v797, 4294901760
    %799 = vmatpush1.msra.mxu0 %v798
    %800 = vmatprep.subr.mxu0 0.0
    %v801 = vand.u32 %v136, 4294901760
    %v802 = vsub.f32 %v136, %v801
    %v803 = vand.u32 %v802, 4294901760
    %804 = vmatpush1.msra.mxu0 %v803
    %805 = vmatprep.subr.mxu0 0.0
    %v806 = vand.u32 %v137, 4294901760
    %v807 = vsub.f32 %v137, %v806
    %v808 = vand.u32 %v807, 4294901760
    %809 = vmatpush1.msra.mxu0 %v808
    %810 = vmatprep.subr.mxu0 0.0
    %v811 = vand.u32 %v138, 4294901760
    %v812 = vsub.f32 %v138, %v811
    %v813 = vand.u32 %v812, 4294901760
    %814 = vmatpush1.msra.mxu0 %v813
    %815 = vmatprep.subr.mxu0 0.0
    %v816 = vand.u32 %v139, 4294901760
    %v817 = vsub.f32 %v139, %v816
    %v818 = vand.u32 %v817, 4294901760
    %819 = vmatpush1.msra.mxu0 %v818
    %820 = vmatprep.subr.mxu0 0.0
    %v821 = vand.u32 %v140, 4294901760
    %v822 = vsub.f32 %v140, %v821
    %v823 = vand.u32 %v822, 4294901760
    %824 = vmatpush1.msra.mxu0 %v823
    %825 = vmatprep.subr.mxu0 0.0
    %v826 = vand.u32 %v141, 4294901760
    %v827 = vsub.f32 %v141, %v826
    %v828 = vand.u32 %v827, 4294901760
    %829 = vmatpush1.msra.mxu0 %v828
    %830 = vmatprep.subr.mxu0 0.0
    %v831 = vand.u32 %v142, 4294901760
    %v832 = vsub.f32 %v142, %v831
    %v833 = vand.u32 %v832, 4294901760
    %834 = vmatpush1.msra.mxu0 %v833
    %835 = vmatprep.subr.mxu0 0.0
    %v836 = vand.u32 %v143, 4294901760
    %v837 = vsub.f32 %v143, %v836
    %v838 = vand.u32 %v837, 4294901760
    %839 = vmatpush1.msra.mxu0 %v838
    %840 = vmatprep.subr.mxu0 0.0
    %v841 = vand.u32 %v144, 4294901760
    %v842 = vsub.f32 %v144, %v841
    %v843 = vand.u32 %v842, 4294901760
    %844 = vmatpush1.msra.mxu0 %v843
    %845 = vmatprep.subr.mxu0 0.0
    %v846 = vand.u32 %v145, 4294901760
    %v847 = vsub.f32 %v145, %v846
    %v848 = vand.u32 %v847, 4294901760
    %849 = vmatpush1.msra.mxu0 %v848
    %850 = vmatprep.subr.mxu0 0.0
    %v851 = vand.u32 %v146, 4294901760
    %v852 = vsub.f32 %v146, %v851
    %v853 = vand.u32 %v852, 4294901760
    %854 = vmatpush1.msra.mxu0 %v853
    %855 = vmatprep.subr.mxu0 0.0
    %v856 = vand.u32 %v147, 4294901760
    %v857 = vsub.f32 %v147, %v856
    %v858 = vand.u32 %v857, 4294901760
    %859 = vmatpush1.msra.mxu0 %v858
    %860 = vmatprep.subr.mxu0 0.0
    %v861 = vand.u32 %v148, 4294901760
    %v862 = vsub.f32 %v148, %v861
    %v863 = vand.u32 %v862, 4294901760
    %864 = vmatpush1.msra.mxu0 %v863
    %865 = vmatprep.subr.mxu0 0.0
    %v866 = vand.u32 %v149, 4294901760
    %v867 = vsub.f32 %v149, %v866
    %v868 = vand.u32 %v867, 4294901760
    %869 = vmatpush1.msra.mxu0 %v868
    %870 = vmatprep.subr.mxu0 0.0
    %v871 = vand.u32 %v150, 4294901760
    %v872 = vsub.f32 %v150, %v871
    %v873 = vand.u32 %v872, 4294901760
    %874 = vmatpush1.msra.mxu0 %v873
    %875 = vmatprep.subr.mxu0 0.0
    %v876 = vand.u32 %v151, 4294901760
    %v877 = vsub.f32 %v151, %v876
    %v878 = vand.u32 %v877, 4294901760
    %879 = vmatpush1.msra.mxu0 %v878
    %880 = vmatprep.subr.mxu0 0.0
    %v881 = vand.u32 %v152, 4294901760
    %v882 = vsub.f32 %v152, %v881
    %v883 = vand.u32 %v882, 4294901760
    %884 = vmatpush1.msra.mxu0 %v883
    %885 = vmatprep.subr.mxu0 0.0
    %v886 = vand.u32 %v153, 4294901760
    %v887 = vsub.f32 %v153, %v886
    %v888 = vand.u32 %v887, 4294901760
    %889 = vmatpush1.msra.mxu0 %v888
    %890 = vmatprep.subr.mxu0 0.0
    %v891 = vand.u32 %v154, 4294901760
    %v892 = vsub.f32 %v154, %v891
    %v893 = vand.u32 %v892, 4294901760
    %894 = vmatpush1.msra.mxu0 %v893
    %895 = vmatprep.subr.mxu0 0.0
    %v896 = vand.u32 %v155, 4294901760
    %v897 = vsub.f32 %v155, %v896
    %v898 = vand.u32 %v897, 4294901760
    %899 = vmatpush1.msra.mxu0 %v898
    %900 = vmatprep.subr.mxu0 0.0
    %v901 = vand.u32 %v156, 4294901760
    %v902 = vsub.f32 %v156, %v901
    %v903 = vand.u32 %v902, 4294901760
    %904 = vmatpush1.msra.mxu0 %v903
    %905 = vmatprep.subr.mxu0 0.0
    %v906 = vand.u32 %v157, 4294901760
    %v907 = vsub.f32 %v157, %v906
    %v908 = vand.u32 %v907, 4294901760
    %909 = vmatpush1.msra.mxu0 %v908
    %v910 = vand.u32 %v159, 4294901760
    %911 = vmatprep.mubr.f32.mxu0 %v910
    %v912 = vand.u32 %v158, 4294901760
    %913 = vmatmul.mubr.f32.gmra.mrb[0].mxu0 %v912
    %v914 = vpop.f32.mrb[0].mxu0
    %v915 = vadd.f32 %v747, %v914
    %v916 = vpop.f32.mrb[0].mxu0
    %917 = vdwg.mxu0
    %918 = vmatprep.subr.mxu0 0.0
    %v919 = vand.u32 %v126, 4294901760
    %920 = vmatpush1.msra.mxu0 %v919
    %921 = vmatprep.subr.mxu0 0.0
    %v922 = vand.u32 %v127, 4294901760
    %923 = vmatpush1.msra.mxu0 %v922
    %924 = vmatprep.subr.mxu0 0.0
    %v925 = vand.u32 %v128, 4294901760
    %926 = vmatpush1.msra.mxu0 %v925
    %927 = vmatprep.subr.mxu0 0.0
    %v928 = vand.u32 %v129, 4294901760
    %929 = vmatpush1.msra.mxu0 %v928
    %930 = vmatprep.subr.mxu0 0.0
    %v931 = vand.u32 %v130, 4294901760
    %932 = vmatpush1.msra.mxu0 %v931
    %933 = vmatprep.subr.mxu0 0.0
    %v934 = vand.u32 %v131, 4294901760
    %935 = vmatpush1.msra.mxu0 %v934
    %936 = vmatprep.subr.mxu0 0.0
    %v937 = vand.u32 %v132, 4294901760
    %938 = vmatpush1.msra.mxu0 %v937
    %939 = vmatprep.subr.mxu0 0.0
    %v940 = vand.u32 %v133, 4294901760
    %941 = vmatpush1.msra.mxu0 %v940
    %942 = vmatprep.subr.mxu0 0.0
    %v943 = vand.u32 %v134, 4294901760
    %944 = vmatpush1.msra.mxu0 %v943
    %945 = vmatprep.subr.mxu0 0.0
    %v946 = vand.u32 %v135, 4294901760
    %947 = vmatpush1.msra.mxu0 %v946
    %948 = vmatprep.subr.mxu0 0.0
    %v949 = vand.u32 %v136, 4294901760
    %950 = vmatpush1.msra.mxu0 %v949
    %951 = vmatprep.subr.mxu0 0.0
    %v952 = vand.u32 %v137, 4294901760
    %953 = vmatpush1.msra.mxu0 %v952
    %954 = vmatprep.subr.mxu0 0.0
    %v955 = vand.u32 %v138, 4294901760
    %956 = vmatpush1.msra.mxu0 %v955
    %957 = vmatprep.subr.mxu0 0.0
    %v958 = vand.u32 %v139, 4294901760
    %959 = vmatpush1.msra.mxu0 %v958
    %960 = vmatprep.subr.mxu0 0.0
    %v961 = vand.u32 %v140, 4294901760
    %962 = vmatpush1.msra.mxu0 %v961
    %963 = vmatprep.subr.mxu0 0.0
    %v964 = vand.u32 %v141, 4294901760
    %965 = vmatpush1.msra.mxu0 %v964
    %966 = vmatprep.subr.mxu0 0.0
    %v967 = vand.u32 %v142, 4294901760
    %968 = vmatpush1.msra.mxu0 %v967
    %969 = vmatprep.subr.mxu0 0.0
    %v970 = vand.u32 %v143, 4294901760
    %971 = vmatpush1.msra.mxu0 %v970
    %972 = vmatprep.subr.mxu0 0.0
    %v973 = vand.u32 %v144, 4294901760
    %974 = vmatpush1.msra.mxu0 %v973
    %975 = vmatprep.subr.mxu0 0.0
    %v976 = vand.u32 %v145, 4294901760
    %977 = vmatpush1.msra.mxu0 %v976
    %978 = vmatprep.subr.mxu0 0.0
    %v979 = vand.u32 %v146, 4294901760
    %980 = vmatpush1.msra.mxu0 %v979
    %981 = vmatprep.subr.mxu0 0.0
    %v982 = vand.u32 %v147, 4294901760
    %983 = vmatpush1.msra.mxu0 %v982
    %984 = vmatprep.subr.mxu0 0.0
    %v985 = vand.u32 %v148, 4294901760
    %986 = vmatpush1.msra.mxu0 %v985
    %987 = vmatprep.subr.mxu0 0.0
    %v988 = vand.u32 %v149, 4294901760
    %989 = vmatpush1.msra.mxu0 %v988
    %990 = vmatprep.subr.mxu0 0.0
    %v991 = vand.u32 %v150, 4294901760
    %992 = vmatpush1.msra.mxu0 %v991
    %993 = vmatprep.subr.mxu0 0.0
    %v994 = vand.u32 %v151, 4294901760
    %995 = vmatpush1.msra.mxu0 %v994
    %996 = vmatprep.subr.mxu0 0.0
    %v997 = vand.u32 %v152, 4294901760
    %998 = vmatpush1.msra.mxu0 %v997
    %999 = vmatprep.subr.mxu0 0.0
    %v1000 = vand.u32 %v153, 4294901760
    %1001 = vmatpush1.msra.mxu0 %v1000
    %1002 = vmatprep.subr.mxu0 0.0
    %v1003 = vand.u32 %v154, 4294901760
    %1004 = vmatpush1.msra.mxu0 %v1003
    %1005 = vmatprep.subr.mxu0 0.0
    %v1006 = vand.u32 %v155, 4294901760
    %1007 = vmatpush1.msra.mxu0 %v1006
    %1008 = vmatprep.subr.mxu0 0.0
    %v1009 = vand.u32 %v156, 4294901760
    %1010 = vmatpush1.msra.mxu0 %v1009
    %1011 = vmatprep.subr.mxu0 0.0
    %v1012 = vand.u32 %v157, 4294901760
    %1013 = vmatpush1.msra.mxu0 %v1012
    %v1014 = vand.u32 %v159, 4294901760
    %1015 = vmatprep.mubr.f32.mxu0 %v1014
    %v1016 = vand.u32 %v158, 4294901760
    %1017 = vmatmul.mubr.f32.gmra.mrb[0].mxu0 %v1016
    %v1018 = vpop.f32.mrb[0].mxu0
    %v1019 = vadd.f32 %v915, %v1018
    %v1020 = vpop.f32.mrb[0].mxu0
    %1021 = vdwg.mxu0
    %v1022 = vmul.f32 %v123, %v123
    %v1023 = vmul.f32 %v125, %v125
    %1024 = vmatprep.subr.mxu0 0.0
    %v1025 = vand.u32 %v126, 4294901760
    %1026 = vmatpush1.msra.mxu0 %v1025
    %1027 = vmatprep.subr.mxu0 0.0
    %v1028 = vand.u32 %v127, 4294901760
    %1029 = vmatpush1.msra.mxu0 %v1028
    %1030 = vmatprep.subr.mxu0 0.0
    %v1031 = vand.u32 %v128, 4294901760
    %1032 = vmatpush1.msra.mxu0 %v1031
    %1033 = vmatprep.subr.mxu0 0.0
    %v1034 = vand.u32 %v129, 4294901760
    %1035 = vmatpush1.msra.mxu0 %v1034
    %1036 = vmatprep.subr.mxu0 0.0
    %v1037 = vand.u32 %v130, 4294901760
    %1038 = vmatpush1.msra.mxu0 %v1037
    %1039 = vmatprep.subr.mxu0 0.0
    %v1040 = vand.u32 %v131, 4294901760
    %1041 = vmatpush1.msra.mxu0 %v1040
    %1042 = vmatprep.subr.mxu0 0.0
    %v1043 = vand.u32 %v132, 4294901760
    %1044 = vmatpush1.msra.mxu0 %v1043
    %1045 = vmatprep.subr.mxu0 0.0
    %v1046 = vand.u32 %v133, 4294901760
    %1047 = vmatpush1.msra.mxu0 %v1046
    %1048 = vmatprep.subr.mxu0 0.0
    %v1049 = vand.u32 %v134, 4294901760
    %1050 = vmatpush1.msra.mxu0 %v1049
    %1051 = vmatprep.subr.mxu0 0.0
    %v1052 = vand.u32 %v135, 4294901760
    %1053 = vmatpush1.msra.mxu0 %v1052
    %1054 = vmatprep.subr.mxu0 0.0
    %v1055 = vand.u32 %v136, 4294901760
    %1056 = vmatpush1.msra.mxu0 %v1055
    %1057 = vmatprep.subr.mxu0 0.0
    %v1058 = vand.u32 %v137, 4294901760
    %1059 = vmatpush1.msra.mxu0 %v1058
    %1060 = vmatprep.subr.mxu0 0.0
    %v1061 = vand.u32 %v138, 4294901760
    %1062 = vmatpush1.msra.mxu0 %v1061
    %1063 = vmatprep.subr.mxu0 0.0
    %v1064 = vand.u32 %v139, 4294901760
    %1065 = vmatpush1.msra.mxu0 %v1064
    %1066 = vmatprep.subr.mxu0 0.0
    %v1067 = vand.u32 %v140, 4294901760
    %1068 = vmatpush1.msra.mxu0 %v1067
    %1069 = vmatprep.subr.mxu0 0.0
    %v1070 = vand.u32 %v141, 4294901760
    %1071 = vmatpush1.msra.mxu0 %v1070
    %1072 = vmatprep.subr.mxu0 0.0
    %v1073 = vand.u32 %v142, 4294901760
    %1074 = vmatpush1.msra.mxu0 %v1073
    %1075 = vmatprep.subr.mxu0 0.0
    %v1076 = vand.u32 %v143, 4294901760
    %1077 = vmatpush1.msra.mxu0 %v1076
    %1078 = vmatprep.subr.mxu0 0.0
    %v1079 = vand.u32 %v144, 4294901760
    %1080 = vmatpush1.msra.mxu0 %v1079
    %1081 = vmatprep.subr.mxu0 0.0
    %v1082 = vand.u32 %v145, 4294901760
    %1083 = vmatpush1.msra.mxu0 %v1082
    %1084 = vmatprep.subr.mxu0 0.0
    %v1085 = vand.u32 %v146, 4294901760
    %1086 = vmatpush1.msra.mxu0 %v1085
    %1087 = vmatprep.subr.mxu0 0.0
    %v1088 = vand.u32 %v147, 4294901760
    %1089 = vmatpush1.msra.mxu0 %v1088
    %1090 = vmatprep.subr.mxu0 0.0
    %v1091 = vand.u32 %v148, 4294901760
    %1092 = vmatpush1.msra.mxu0 %v1091
    %1093 = vmatprep.subr.mxu0 0.0
    %v1094 = vand.u32 %v149, 4294901760
    %1095 = vmatpush1.msra.mxu0 %v1094
    %1096 = vmatprep.subr.mxu0 0.0
    %v1097 = vand.u32 %v150, 4294901760
    %1098 = vmatpush1.msra.mxu0 %v1097
    %1099 = vmatprep.subr.mxu0 0.0
    %v1100 = vand.u32 %v151, 4294901760
    %1101 = vmatpush1.msra.mxu0 %v1100
    %1102 = vmatprep.subr.mxu0 0.0
    %v1103 = vand.u32 %v152, 4294901760
    %1104 = vmatpush1.msra.mxu0 %v1103
    %1105 = vmatprep.subr.mxu0 0.0
    %v1106 = vand.u32 %v153, 4294901760
    %1107 = vmatpush1.msra.mxu0 %v1106
    %1108 = vmatprep.subr.mxu0 0.0
    %v1109 = vand.u32 %v154, 4294901760
    %1110 = vmatpush1.msra.mxu0 %v1109
    %1111 = vmatprep.subr.mxu0 0.0
    %v1112 = vand.u32 %v155, 4294901760
    %1113 = vmatpush1.msra.mxu0 %v1112
    %1114 = vmatprep.subr.mxu0 0.0
    %v1115 = vand.u32 %v156, 4294901760
    %1116 = vmatpush1.msra.mxu0 %v1115
    %1117 = vmatprep.subr.mxu0 0.0
    %v1118 = vand.u32 %v157, 4294901760
    %1119 = vmatpush1.msra.mxu0 %v1118
    %v1120 = vand.u32 %v1023, 4294901760
    %v1121 = vsub.f32 %v1023, %v1120
    %v1122 = vand.u32 %v1121, 4294901760
    %v1123 = vsub.f32 %v1121, %v1122
    %v1124 = vand.u32 %v1123, 4294901760
    %1125 = vmatprep.mubr.f32.mxu0 %v1124
    %v1126 = vand.u32 %v1022, 4294901760
    %v1127 = vsub.f32 %v1022, %v1126
    %v1128 = vand.u32 %v1127, 4294901760
    %v1129 = vsub.f32 %v1127, %v1128
    %v1130 = vand.u32 %v1129, 4294901760
    %1131 = vmatmul.mubr.f32.gmra.mrb[0].mxu0 %v1130
    %v1132 = vpop.f32.mrb[0].mxu0
    %v1133 = vadd.f32 0.0, %v1132
    %v1134 = vpop.f32.mrb[0].mxu0
    %1135 = vdwg.mxu0
    %1136 = vmatprep.subr.mxu0 0.0
    %v1137 = vand.u32 %v126, 4294901760
    %v1138 = vsub.f32 %v126, %v1137
    %v1139 = vand.u32 %v1138, 4294901760
    %v1140 = vsub.f32 %v1138, %v1139
    %v1141 = vand.u32 %v1140, 4294901760
    %1142 = vmatpush1.msra.mxu0 %v1141
    %1143 = vmatprep.subr.mxu0 0.0
    %v1144 = vand.u32 %v127, 4294901760
    %v1145 = vsub.f32 %v127, %v1144
    %v1146 = vand.u32 %v1145, 4294901760
    %v1147 = vsub.f32 %v1145, %v1146
    %v1148 = vand.u32 %v1147, 4294901760
    %1149 = vmatpush1.msra.mxu0 %v1148
    %1150 = vmatprep.subr.mxu0 0.0
    %v1151 = vand.u32 %v128, 4294901760
    %v1152 = vsub.f32 %v128, %v1151
    %v1153 = vand.u32 %v1152, 4294901760
    %v1154 = vsub.f32 %v1152, %v1153
    %v1155 = vand.u32 %v1154, 4294901760
    %1156 = vmatpush1.msra.mxu0 %v1155
    %1157 = vmatprep.subr.mxu0 0.0
    %v1158 = vand.u32 %v129, 4294901760
    %v1159 = vsub.f32 %v129, %v1158
    %v1160 = vand.u32 %v1159, 4294901760
    %v1161 = vsub.f32 %v1159, %v1160
    %v1162 = vand.u32 %v1161, 4294901760
    %1163 = vmatpush1.msra.mxu0 %v1162
    %1164 = vmatprep.subr.mxu0 0.0
    %v1165 = vand.u32 %v130, 4294901760
    %v1166 = vsub.f32 %v130, %v1165
    %v1167 = vand.u32 %v1166, 4294901760
    %v1168 = vsub.f32 %v1166, %v1167
    %v1169 = vand.u32 %v1168, 4294901760
    %1170 = vmatpush1.msra.mxu0 %v1169
    %1171 = vmatprep.subr.mxu0 0.0
    %v1172 = vand.u32 %v131, 4294901760
    %v1173 = vsub.f32 %v131, %v1172
    %v1174 = vand.u32 %v1173, 4294901760
    %v1175 = vsub.f32 %v1173, %v1174
    %v1176 = vand.u32 %v1175, 4294901760
    %1177 = vmatpush1.msra.mxu0 %v1176
    %1178 = vmatprep.subr.mxu0 0.0
    %v1179 = vand.u32 %v132, 4294901760
    %v1180 = vsub.f32 %v132, %v1179
    %v1181 = vand.u32 %v1180, 4294901760
    %v1182 = vsub.f32 %v1180, %v1181
    %v1183 = vand.u32 %v1182, 4294901760
    %1184 = vmatpush1.msra.mxu0 %v1183
    %1185 = vmatprep.subr.mxu0 0.0
    %v1186 = vand.u32 %v133, 4294901760
    %v1187 = vsub.f32 %v133, %v1186
    %v1188 = vand.u32 %v1187, 4294901760
    %v1189 = vsub.f32 %v1187, %v1188
    %v1190 = vand.u32 %v1189, 4294901760
    %1191 = vmatpush1.msra.mxu0 %v1190
    %1192 = vmatprep.subr.mxu0 0.0
    %v1193 = vand.u32 %v134, 4294901760
    %v1194 = vsub.f32 %v134, %v1193
    %v1195 = vand.u32 %v1194, 4294901760
    %v1196 = vsub.f32 %v1194, %v1195
    %v1197 = vand.u32 %v1196, 4294901760
    %1198 = vmatpush1.msra.mxu0 %v1197
    %1199 = vmatprep.subr.mxu0 0.0
    %v1200 = vand.u32 %v135, 4294901760
    %v1201 = vsub.f32 %v135, %v1200
    %v1202 = vand.u32 %v1201, 4294901760
    %v1203 = vsub.f32 %v1201, %v1202
    %v1204 = vand.u32 %v1203, 4294901760
    %1205 = vmatpush1.msra.mxu0 %v1204
    %1206 = vmatprep.subr.mxu0 0.0
    %v1207 = vand.u32 %v136, 4294901760
    %v1208 = vsub.f32 %v136, %v1207
    %v1209 = vand.u32 %v1208, 4294901760
    %v1210 = vsub.f32 %v1208, %v1209
    %v1211 = vand.u32 %v1210, 4294901760
    %1212 = vmatpush1.msra.mxu0 %v1211
    %1213 = vmatprep.subr.mxu0 0.0
    %v1214 = vand.u32 %v137, 4294901760
    %v1215 = vsub.f32 %v137, %v1214
    %v1216 = vand.u32 %v1215, 4294901760
    %v1217 = vsub.f32 %v1215, %v1216
    %v1218 = vand.u32 %v1217, 4294901760
    %1219 = vmatpush1.msra.mxu0 %v1218
    %1220 = vmatprep.subr.mxu0 0.0
    %v1221 = vand.u32 %v138, 4294901760
    %v1222 = vsub.f32 %v138, %v1221
    %v1223 = vand.u32 %v1222, 4294901760
    %v1224 = vsub.f32 %v1222, %v1223
    %v1225 = vand.u32 %v1224, 4294901760
    %1226 = vmatpush1.msra.mxu0 %v1225
    %1227 = vmatprep.subr.mxu0 0.0
    %v1228 = vand.u32 %v139, 4294901760
    %v1229 = vsub.f32 %v139, %v1228
    %v1230 = vand.u32 %v1229, 4294901760
    %v1231 = vsub.f32 %v1229, %v1230
    %v1232 = vand.u32 %v1231, 4294901760
    %1233 = vmatpush1.msra.mxu0 %v1232
    %1234 = vmatprep.subr.mxu0 0.0
    %v1235 = vand.u32 %v140, 4294901760
    %v1236 = vsub.f32 %v140, %v1235
    %v1237 = vand.u32 %v1236, 4294901760
    %v1238 = vsub.f32 %v1236, %v1237
    %v1239 = vand.u32 %v1238, 4294901760
    %1240 = vmatpush1.msra.mxu0 %v1239
    %1241 = vmatprep.subr.mxu0 0.0
    %v1242 = vand.u32 %v141, 4294901760
    %v1243 = vsub.f32 %v141, %v1242
    %v1244 = vand.u32 %v1243, 4294901760
    %v1245 = vsub.f32 %v1243, %v1244
    %v1246 = vand.u32 %v1245, 4294901760
    %1247 = vmatpush1.msra.mxu0 %v1246
    %1248 = vmatprep.subr.mxu0 0.0
    %v1249 = vand.u32 %v142, 4294901760
    %v1250 = vsub.f32 %v142, %v1249
    %v1251 = vand.u32 %v1250, 4294901760
    %v1252 = vsub.f32 %v1250, %v1251
    %v1253 = vand.u32 %v1252, 4294901760
    %1254 = vmatpush1.msra.mxu0 %v1253
    %1255 = vmatprep.subr.mxu0 0.0
    %v1256 = vand.u32 %v143, 4294901760
    %v1257 = vsub.f32 %v143, %v1256
    %v1258 = vand.u32 %v1257, 4294901760
    %v1259 = vsub.f32 %v1257, %v1258
    %v1260 = vand.u32 %v1259, 4294901760
    %1261 = vmatpush1.msra.mxu0 %v1260
    %1262 = vmatprep.subr.mxu0 0.0
    %v1263 = vand.u32 %v144, 4294901760
    %v1264 = vsub.f32 %v144, %v1263
    %v1265 = vand.u32 %v1264, 4294901760
    %v1266 = vsub.f32 %v1264, %v1265
    %v1267 = vand.u32 %v1266, 4294901760
    %1268 = vmatpush1.msra.mxu0 %v1267
    %1269 = vmatprep.subr.mxu0 0.0
    %v1270 = vand.u32 %v145, 4294901760
    %v1271 = vsub.f32 %v145, %v1270
    %v1272 = vand.u32 %v1271, 4294901760
    %v1273 = vsub.f32 %v1271, %v1272
    %v1274 = vand.u32 %v1273, 4294901760
    %1275 = vmatpush1.msra.mxu0 %v1274
    %1276 = vmatprep.subr.mxu0 0.0
    %v1277 = vand.u32 %v146, 4294901760
    %v1278 = vsub.f32 %v146, %v1277
    %v1279 = vand.u32 %v1278, 4294901760
    %v1280 = vsub.f32 %v1278, %v1279
    %v1281 = vand.u32 %v1280, 4294901760
    %1282 = vmatpush1.msra.mxu0 %v1281
    %1283 = vmatprep.subr.mxu0 0.0
    %v1284 = vand.u32 %v147, 4294901760
    %v1285 = vsub.f32 %v147, %v1284
    %v1286 = vand.u32 %v1285, 4294901760
    %v1287 = vsub.f32 %v1285, %v1286
    %v1288 = vand.u32 %v1287, 4294901760
    %1289 = vmatpush1.msra.mxu0 %v1288
    %1290 = vmatprep.subr.mxu0 0.0
    %v1291 = vand.u32 %v148, 4294901760
    %v1292 = vsub.f32 %v148, %v1291
    %v1293 = vand.u32 %v1292, 4294901760
    %v1294 = vsub.f32 %v1292, %v1293
    %v1295 = vand.u32 %v1294, 4294901760
    %1296 = vmatpush1.msra.mxu0 %v1295
    %1297 = vmatprep.subr.mxu0 0.0
    %v1298 = vand.u32 %v149, 4294901760
    %v1299 = vsub.f32 %v149, %v1298
    %v1300 = vand.u32 %v1299, 4294901760
    %v1301 = vsub.f32 %v1299, %v1300
    %v1302 = vand.u32 %v1301, 4294901760
    %1303 = vmatpush1.msra.mxu0 %v1302
    %1304 = vmatprep.subr.mxu0 0.0
    %v1305 = vand.u32 %v150, 4294901760
    %v1306 = vsub.f32 %v150, %v1305
    %v1307 = vand.u32 %v1306, 4294901760
    %v1308 = vsub.f32 %v1306, %v1307
    %v1309 = vand.u32 %v1308, 4294901760
    %1310 = vmatpush1.msra.mxu0 %v1309
    %1311 = vmatprep.subr.mxu0 0.0
    %v1312 = vand.u32 %v151, 4294901760
    %v1313 = vsub.f32 %v151, %v1312
    %v1314 = vand.u32 %v1313, 4294901760
    %v1315 = vsub.f32 %v1313, %v1314
    %v1316 = vand.u32 %v1315, 4294901760
    %1317 = vmatpush1.msra.mxu0 %v1316
    %1318 = vmatprep.subr.mxu0 0.0
    %v1319 = vand.u32 %v152, 4294901760
    %v1320 = vsub.f32 %v152, %v1319
    %v1321 = vand.u32 %v1320, 4294901760
    %v1322 = vsub.f32 %v1320, %v1321
    %v1323 = vand.u32 %v1322, 4294901760
    %1324 = vmatpush1.msra.mxu0 %v1323
    %1325 = vmatprep.subr.mxu0 0.0
    %v1326 = vand.u32 %v153, 4294901760
    %v1327 = vsub.f32 %v153, %v1326
    %v1328 = vand.u32 %v1327, 4294901760
    %v1329 = vsub.f32 %v1327, %v1328
    %v1330 = vand.u32 %v1329, 4294901760
    %1331 = vmatpush1.msra.mxu0 %v1330
    %1332 = vmatprep.subr.mxu0 0.0
    %v1333 = vand.u32 %v154, 4294901760
    %v1334 = vsub.f32 %v154, %v1333
    %v1335 = vand.u32 %v1334, 4294901760
    %v1336 = vsub.f32 %v1334, %v1335
    %v1337 = vand.u32 %v1336, 4294901760
    %1338 = vmatpush1.msra.mxu0 %v1337
    %1339 = vmatprep.subr.mxu0 0.0
    %v1340 = vand.u32 %v155, 4294901760
    %v1341 = vsub.f32 %v155, %v1340
    %v1342 = vand.u32 %v1341, 4294901760
    %v1343 = vsub.f32 %v1341, %v1342
    %v1344 = vand.u32 %v1343, 4294901760
    %1345 = vmatpush1.msra.mxu0 %v1344
    %1346 = vmatprep.subr.mxu0 0.0
    %v1347 = vand.u32 %v156, 4294901760
    %v1348 = vsub.f32 %v156, %v1347
    %v1349 = vand.u32 %v1348, 4294901760
    %v1350 = vsub.f32 %v1348, %v1349
    %v1351 = vand.u32 %v1350, 4294901760
    %1352 = vmatpush1.msra.mxu0 %v1351
    %1353 = vmatprep.subr.mxu0 0.0
    %v1354 = vand.u32 %v157, 4294901760
    %v1355 = vsub.f32 %v157, %v1354
    %v1356 = vand.u32 %v1355, 4294901760
    %v1357 = vsub.f32 %v1355, %v1356
    %v1358 = vand.u32 %v1357, 4294901760
    %1359 = vmatpush1.msra.mxu0 %v1358
    %v1360 = vand.u32 %v1023, 4294901760
    %1361 = vmatprep.mubr.f32.mxu0 %v1360
    %v1362 = vand.u32 %v1022, 4294901760
    %1363 = vmatmul.mubr.f32.gmra.mrb[0].mxu0 %v1362
    %v1364 = vpop.f32.mrb[0].mxu0
    %v1365 = vadd.f32 %v1133, %v1364
    %v1366 = vpop.f32.mrb[0].mxu0
    %1367 = vdwg.mxu0
    %1368 = vmatprep.subr.mxu0 0.0
    %v1369 = vand.u32 %v126, 4294901760
    %v1370 = vsub.f32 %v126, %v1369
    %1371 = vmatpush1.msra.mxu0 %v1370
    %1372 = vmatprep.subr.mxu0 0.0
    %v1373 = vand.u32 %v127, 4294901760
    %v1374 = vsub.f32 %v127, %v1373
    %1375 = vmatpush1.msra.mxu0 %v1374
    %1376 = vmatprep.subr.mxu0 0.0
    %v1377 = vand.u32 %v128, 4294901760
    %v1378 = vsub.f32 %v128, %v1377
    %1379 = vmatpush1.msra.mxu0 %v1378
    %1380 = vmatprep.subr.mxu0 0.0
    %v1381 = vand.u32 %v129, 4294901760
    %v1382 = vsub.f32 %v129, %v1381
    %1383 = vmatpush1.msra.mxu0 %v1382
    %1384 = vmatprep.subr.mxu0 0.0
    %v1385 = vand.u32 %v130, 4294901760
    %v1386 = vsub.f32 %v130, %v1385
    %1387 = vmatpush1.msra.mxu0 %v1386
    %1388 = vmatprep.subr.mxu0 0.0
    %v1389 = vand.u32 %v131, 4294901760
    %v1390 = vsub.f32 %v131, %v1389
    %1391 = vmatpush1.msra.mxu0 %v1390
    %1392 = vmatprep.subr.mxu0 0.0
    %v1393 = vand.u32 %v132, 4294901760
    %v1394 = vsub.f32 %v132, %v1393
    %1395 = vmatpush1.msra.mxu0 %v1394
    %1396 = vmatprep.subr.mxu0 0.0
    %v1397 = vand.u32 %v133, 4294901760
    %v1398 = vsub.f32 %v133, %v1397
    %1399 = vmatpush1.msra.mxu0 %v1398
    %1400 = vmatprep.subr.mxu0 0.0
    %v1401 = vand.u32 %v134, 4294901760
    %v1402 = vsub.f32 %v134, %v1401
    %1403 = vmatpush1.msra.mxu0 %v1402
    %1404 = vmatprep.subr.mxu0 0.0
    %v1405 = vand.u32 %v135, 4294901760
    %v1406 = vsub.f32 %v135, %v1405
    %1407 = vmatpush1.msra.mxu0 %v1406
    %1408 = vmatprep.subr.mxu0 0.0
    %v1409 = vand.u32 %v136, 4294901760
    %v1410 = vsub.f32 %v136, %v1409
    %1411 = vmatpush1.msra.mxu0 %v1410
    %1412 = vmatprep.subr.mxu0 0.0
    %v1413 = vand.u32 %v137, 4294901760
    %v1414 = vsub.f32 %v137, %v1413
    %1415 = vmatpush1.msra.mxu0 %v1414
    %1416 = vmatprep.subr.mxu0 0.0
    %v1417 = vand.u32 %v138, 4294901760
    %v1418 = vsub.f32 %v138, %v1417
    %1419 = vmatpush1.msra.mxu0 %v1418
    %1420 = vmatprep.subr.mxu0 0.0
    %v1421 = vand.u32 %v139, 4294901760
    %v1422 = vsub.f32 %v139, %v1421
    %1423 = vmatpush1.msra.mxu0 %v1422
    %1424 = vmatprep.subr.mxu0 0.0
    %v1425 = vand.u32 %v140, 4294901760
    %v1426 = vsub.f32 %v140, %v1425
    %1427 = vmatpush1.msra.mxu0 %v1426
    %1428 = vmatprep.subr.mxu0 0.0
    %v1429 = vand.u32 %v141, 4294901760
    %v1430 = vsub.f32 %v141, %v1429
    %1431 = vmatpush1.msra.mxu0 %v1430
    %1432 = vmatprep.subr.mxu0 0.0
    %v1433 = vand.u32 %v142, 4294901760
    %v1434 = vsub.f32 %v142, %v1433
    %1435 = vmatpush1.msra.mxu0 %v1434
    %1436 = vmatprep.subr.mxu0 0.0
    %v1437 = vand.u32 %v143, 4294901760
    %v1438 = vsub.f32 %v143, %v1437
    %1439 = vmatpush1.msra.mxu0 %v1438
    %1440 = vmatprep.subr.mxu0 0.0
    %v1441 = vand.u32 %v144, 4294901760
    %v1442 = vsub.f32 %v144, %v1441
    %1443 = vmatpush1.msra.mxu0 %v1442
    %1444 = vmatprep.subr.mxu0 0.0
    %v1445 = vand.u32 %v145, 4294901760
    %v1446 = vsub.f32 %v145, %v1445
    %1447 = vmatpush1.msra.mxu0 %v1446
    %1448 = vmatprep.subr.mxu0 0.0
    %v1449 = vand.u32 %v146, 4294901760
    %v1450 = vsub.f32 %v146, %v1449
    %1451 = vmatpush1.msra.mxu0 %v1450
    %1452 = vmatprep.subr.mxu0 0.0
    %v1453 = vand.u32 %v147, 4294901760
    %v1454 = vsub.f32 %v147, %v1453
    %1455 = vmatpush1.msra.mxu0 %v1454
    %1456 = vmatprep.subr.mxu0 0.0
    %v1457 = vand.u32 %v148, 4294901760
    %v1458 = vsub.f32 %v148, %v1457
    %1459 = vmatpush1.msra.mxu0 %v1458
    %1460 = vmatprep.subr.mxu0 0.0
    %v1461 = vand.u32 %v149, 4294901760
    %v1462 = vsub.f32 %v149, %v1461
    %1463 = vmatpush1.msra.mxu0 %v1462
    %1464 = vmatprep.subr.mxu0 0.0
    %v1465 = vand.u32 %v150, 4294901760
    %v1466 = vsub.f32 %v150, %v1465
    %1467 = vmatpush1.msra.mxu0 %v1466
    %1468 = vmatprep.subr.mxu0 0.0
    %v1469 = vand.u32 %v151, 4294901760
    %v1470 = vsub.f32 %v151, %v1469
    %1471 = vmatpush1.msra.mxu0 %v1470
    %1472 = vmatprep.subr.mxu0 0.0
    %v1473 = vand.u32 %v152, 4294901760
    %v1474 = vsub.f32 %v152, %v1473
    %1475 = vmatpush1.msra.mxu0 %v1474
    %1476 = vmatprep.subr.mxu0 0.0
    %v1477 = vand.u32 %v153, 4294901760
    %v1478 = vsub.f32 %v153, %v1477
    %1479 = vmatpush1.msra.mxu0 %v1478
    %1480 = vmatprep.subr.mxu0 0.0
    %v1481 = vand.u32 %v154, 4294901760
    %v1482 = vsub.f32 %v154, %v1481
    %1483 = vmatpush1.msra.mxu0 %v1482
    %1484 = vmatprep.subr.mxu0 0.0
    %v1485 = vand.u32 %v155, 4294901760
    %v1486 = vsub.f32 %v155, %v1485
    %1487 = vmatpush1.msra.mxu0 %v1486
    %1488 = vmatprep.subr.mxu0 0.0
    %v1489 = vand.u32 %v156, 4294901760
    %v1490 = vsub.f32 %v156, %v1489
    %1491 = vmatpush1.msra.mxu0 %v1490
    %1492 = vmatprep.subr.mxu0 0.0
    %v1493 = vand.u32 %v157, 4294901760
    %v1494 = vsub.f32 %v157, %v1493
    %1495 = vmatpush1.msra.mxu0 %v1494
    %v1496 = vand.u32 %v1023, 4294901760
    %v1497 = vsub.f32 %v1023, %v1496
    %1498 = vmatprep.mubr.f32.mxu0 %v1497
    %v1499 = vand.u32 %v1022, 4294901760
    %v1500 = vsub.f32 %v1022, %v1499
    %1501 = vmatmul.mubr.f32.gmra.mrb[0].mxu0 %v1500
    %v1502 = vpop.f32.mrb[0].mxu0
    %v1503 = vadd.f32 %v1365, %v1502
    %v1504 = vpop.f32.mrb[0].mxu0
    %1505 = vdwg.mxu0
    %1506 = vmatprep.subr.mxu0 0.0
    %v1507 = vand.u32 %v126, 4294901760
    %1508 = vmatpush1.msra.mxu0 %v1507
    %1509 = vmatprep.subr.mxu0 0.0
    %v1510 = vand.u32 %v127, 4294901760
    %1511 = vmatpush1.msra.mxu0 %v1510
    %1512 = vmatprep.subr.mxu0 0.0
    %v1513 = vand.u32 %v128, 4294901760
    %1514 = vmatpush1.msra.mxu0 %v1513
    %1515 = vmatprep.subr.mxu0 0.0
    %v1516 = vand.u32 %v129, 4294901760
    %1517 = vmatpush1.msra.mxu0 %v1516
    %1518 = vmatprep.subr.mxu0 0.0
    %v1519 = vand.u32 %v130, 4294901760
    %1520 = vmatpush1.msra.mxu0 %v1519
    %1521 = vmatprep.subr.mxu0 0.0
    %v1522 = vand.u32 %v131, 4294901760
    %1523 = vmatpush1.msra.mxu0 %v1522
    %1524 = vmatprep.subr.mxu0 0.0
    %v1525 = vand.u32 %v132, 4294901760
    %1526 = vmatpush1.msra.mxu0 %v1525
    %1527 = vmatprep.subr.mxu0 0.0
    %v1528 = vand.u32 %v133, 4294901760
    %1529 = vmatpush1.msra.mxu0 %v1528
    %1530 = vmatprep.subr.mxu0 0.0
    %v1531 = vand.u32 %v134, 4294901760
    %1532 = vmatpush1.msra.mxu0 %v1531
    %1533 = vmatprep.subr.mxu0 0.0
    %v1534 = vand.u32 %v135, 4294901760
    %1535 = vmatpush1.msra.mxu0 %v1534
    %1536 = vmatprep.subr.mxu0 0.0
    %v1537 = vand.u32 %v136, 4294901760
    %1538 = vmatpush1.msra.mxu0 %v1537
    %1539 = vmatprep.subr.mxu0 0.0
    %v1540 = vand.u32 %v137, 4294901760
    %1541 = vmatpush1.msra.mxu0 %v1540
    %1542 = vmatprep.subr.mxu0 0.0
    %v1543 = vand.u32 %v138, 4294901760
    %1544 = vmatpush1.msra.mxu0 %v1543
    %1545 = vmatprep.subr.mxu0 0.0
    %v1546 = vand.u32 %v139, 4294901760
    %1547 = vmatpush1.msra.mxu0 %v1546
    %1548 = vmatprep.subr.mxu0 0.0
    %v1549 = vand.u32 %v140, 4294901760
    %1550 = vmatpush1.msra.mxu0 %v1549
    %1551 = vmatprep.subr.mxu0 0.0
    %v1552 = vand.u32 %v141, 4294901760
    %1553 = vmatpush1.msra.mxu0 %v1552
    %1554 = vmatprep.subr.mxu0 0.0
    %v1555 = vand.u32 %v142, 4294901760
    %1556 = vmatpush1.msra.mxu0 %v1555
    %1557 = vmatprep.subr.mxu0 0.0
    %v1558 = vand.u32 %v143, 4294901760
    %1559 = vmatpush1.msra.mxu0 %v1558
    %1560 = vmatprep.subr.mxu0 0.0
    %v1561 = vand.u32 %v144, 4294901760
    %1562 = vmatpush1.msra.mxu0 %v1561
    %1563 = vmatprep.subr.mxu0 0.0
    %v1564 = vand.u32 %v145, 4294901760
    %1565 = vmatpush1.msra.mxu0 %v1564
    %1566 = vmatprep.subr.mxu0 0.0
    %v1567 = vand.u32 %v146, 4294901760
    %1568 = vmatpush1.msra.mxu0 %v1567
    %1569 = vmatprep.subr.mxu0 0.0
    %v1570 = vand.u32 %v147, 4294901760
    %1571 = vmatpush1.msra.mxu0 %v1570
    %1572 = vmatprep.subr.mxu0 0.0
    %v1573 = vand.u32 %v148, 4294901760
    %1574 = vmatpush1.msra.mxu0 %v1573
    %1575 = vmatprep.subr.mxu0 0.0
    %v1576 = vand.u32 %v149, 4294901760
    %1577 = vmatpush1.msra.mxu0 %v1576
    %1578 = vmatprep.subr.mxu0 0.0
    %v1579 = vand.u32 %v150, 4294901760
    %1580 = vmatpush1.msra.mxu0 %v1579
    %1581 = vmatprep.subr.mxu0 0.0
    %v1582 = vand.u32 %v151, 4294901760
    %1583 = vmatpush1.msra.mxu0 %v1582
    %1584 = vmatprep.subr.mxu0 0.0
    %v1585 = vand.u32 %v152, 4294901760
    %1586 = vmatpush1.msra.mxu0 %v1585
    %1587 = vmatprep.subr.mxu0 0.0
    %v1588 = vand.u32 %v153, 4294901760
    %1589 = vmatpush1.msra.mxu0 %v1588
    %1590 = vmatprep.subr.mxu0 0.0
    %v1591 = vand.u32 %v154, 4294901760
    %1592 = vmatpush1.msra.mxu0 %v1591
    %1593 = vmatprep.subr.mxu0 0.0
    %v1594 = vand.u32 %v155, 4294901760
    %1595 = vmatpush1.msra.mxu0 %v1594
    %1596 = vmatprep.subr.mxu0 0.0
    %v1597 = vand.u32 %v156, 4294901760
    %1598 = vmatpush1.msra.mxu0 %v1597
    %1599 = vmatprep.subr.mxu0 0.0
    %v1600 = vand.u32 %v157, 4294901760
    %1601 = vmatpush1.msra.mxu0 %v1600
    %v1602 = vand.u32 %v1023, 4294901760
    %v1603 = vsub.f32 %v1023, %v1602
    %v1604 = vand.u32 %v1603, 4294901760
    %1605 = vmatprep.mubr.f32.mxu0 %v1604
    %v1606 = vand.u32 %v1022, 4294901760
    %v1607 = vsub.f32 %v1022, %v1606
    %v1608 = vand.u32 %v1607, 4294901760
    %1609 = vmatmul.mubr.f32.gmra.mrb[0].mxu0 %v1608
    %v1610 = vpop.f32.mrb[0].mxu0
    %v1611 = vadd.f32 %v1503, %v1610
    %v1612 = vpop.f32.mrb[0].mxu0
    %1613 = vdwg.mxu0
    %1614 = vmatprep.subr.mxu0 0.0
    %v1615 = vand.u32 %v126, 4294901760
    %v1616 = vsub.f32 %v126, %v1615
    %v1617 = vand.u32 %v1616, 4294901760
    %1618 = vmatpush1.msra.mxu0 %v1617
    %1619 = vmatprep.subr.mxu0 0.0
    %v1620 = vand.u32 %v127, 4294901760
    %v1621 = vsub.f32 %v127, %v1620
    %v1622 = vand.u32 %v1621, 4294901760
    %1623 = vmatpush1.msra.mxu0 %v1622
    %1624 = vmatprep.subr.mxu0 0.0
    %v1625 = vand.u32 %v128, 4294901760
    %v1626 = vsub.f32 %v128, %v1625
    %v1627 = vand.u32 %v1626, 4294901760
    %1628 = vmatpush1.msra.mxu0 %v1627
    %1629 = vmatprep.subr.mxu0 0.0
    %v1630 = vand.u32 %v129, 4294901760
    %v1631 = vsub.f32 %v129, %v1630
    %v1632 = vand.u32 %v1631, 4294901760
    %1633 = vmatpush1.msra.mxu0 %v1632
    %1634 = vmatprep.subr.mxu0 0.0
    %v1635 = vand.u32 %v130, 4294901760
    %v1636 = vsub.f32 %v130, %v1635
    %v1637 = vand.u32 %v1636, 4294901760
    %1638 = vmatpush1.msra.mxu0 %v1637
    %1639 = vmatprep.subr.mxu0 0.0
    %v1640 = vand.u32 %v131, 4294901760
    %v1641 = vsub.f32 %v131, %v1640
    %v1642 = vand.u32 %v1641, 4294901760
    %1643 = vmatpush1.msra.mxu0 %v1642
    %1644 = vmatprep.subr.mxu0 0.0
    %v1645 = vand.u32 %v132, 4294901760
    %v1646 = vsub.f32 %v132, %v1645
    %v1647 = vand.u32 %v1646, 4294901760
    %1648 = vmatpush1.msra.mxu0 %v1647
    %1649 = vmatprep.subr.mxu0 0.0
    %v1650 = vand.u32 %v133, 4294901760
    %v1651 = vsub.f32 %v133, %v1650
    %v1652 = vand.u32 %v1651, 4294901760
    %1653 = vmatpush1.msra.mxu0 %v1652
    %1654 = vmatprep.subr.mxu0 0.0
    %v1655 = vand.u32 %v134, 4294901760
    %v1656 = vsub.f32 %v134, %v1655
    %v1657 = vand.u32 %v1656, 4294901760
    %1658 = vmatpush1.msra.mxu0 %v1657
    %1659 = vmatprep.subr.mxu0 0.0
    %v1660 = vand.u32 %v135, 4294901760
    %v1661 = vsub.f32 %v135, %v1660
    %v1662 = vand.u32 %v1661, 4294901760
    %1663 = vmatpush1.msra.mxu0 %v1662
    %1664 = vmatprep.subr.mxu0 0.0
    %v1665 = vand.u32 %v136, 4294901760
    %v1666 = vsub.f32 %v136, %v1665
    %v1667 = vand.u32 %v1666, 4294901760
    %1668 = vmatpush1.msra.mxu0 %v1667
    %1669 = vmatprep.subr.mxu0 0.0
    %v1670 = vand.u32 %v137, 4294901760
    %v1671 = vsub.f32 %v137, %v1670
    %v1672 = vand.u32 %v1671, 4294901760
    %1673 = vmatpush1.msra.mxu0 %v1672
    %1674 = vmatprep.subr.mxu0 0.0
    %v1675 = vand.u32 %v138, 4294901760
    %v1676 = vsub.f32 %v138, %v1675
    %v1677 = vand.u32 %v1676, 4294901760
    %1678 = vmatpush1.msra.mxu0 %v1677
    %1679 = vmatprep.subr.mxu0 0.0
    %v1680 = vand.u32 %v139, 4294901760
    %v1681 = vsub.f32 %v139, %v1680
    %v1682 = vand.u32 %v1681, 4294901760
    %1683 = vmatpush1.msra.mxu0 %v1682
    %1684 = vmatprep.subr.mxu0 0.0
    %v1685 = vand.u32 %v140, 4294901760
    %v1686 = vsub.f32 %v140, %v1685
    %v1687 = vand.u32 %v1686, 4294901760
    %1688 = vmatpush1.msra.mxu0 %v1687
    %1689 = vmatprep.subr.mxu0 0.0
    %v1690 = vand.u32 %v141, 4294901760
    %v1691 = vsub.f32 %v141, %v1690
    %v1692 = vand.u32 %v1691, 4294901760
    %1693 = vmatpush1.msra.mxu0 %v1692
    %1694 = vmatprep.subr.mxu0 0.0
    %v1695 = vand.u32 %v142, 4294901760
    %v1696 = vsub.f32 %v142, %v1695
    %v1697 = vand.u32 %v1696, 4294901760
    %1698 = vmatpush1.msra.mxu0 %v1697
    %1699 = vmatprep.subr.mxu0 0.0
    %v1700 = vand.u32 %v143, 4294901760
    %v1701 = vsub.f32 %v143, %v1700
    %v1702 = vand.u32 %v1701, 4294901760
    %1703 = vmatpush1.msra.mxu0 %v1702
    %1704 = vmatprep.subr.mxu0 0.0
    %v1705 = vand.u32 %v144, 4294901760
    %v1706 = vsub.f32 %v144, %v1705
    %v1707 = vand.u32 %v1706, 4294901760
    %1708 = vmatpush1.msra.mxu0 %v1707
    %1709 = vmatprep.subr.mxu0 0.0
    %v1710 = vand.u32 %v145, 4294901760
    %v1711 = vsub.f32 %v145, %v1710
    %v1712 = vand.u32 %v1711, 4294901760
    %1713 = vmatpush1.msra.mxu0 %v1712
    %1714 = vmatprep.subr.mxu0 0.0
    %v1715 = vand.u32 %v146, 4294901760
    %v1716 = vsub.f32 %v146, %v1715
    %v1717 = vand.u32 %v1716, 4294901760
    %1718 = vmatpush1.msra.mxu0 %v1717
    %1719 = vmatprep.subr.mxu0 0.0
    %v1720 = vand.u32 %v147, 4294901760
    %v1721 = vsub.f32 %v147, %v1720
    %v1722 = vand.u32 %v1721, 4294901760
    %1723 = vmatpush1.msra.mxu0 %v1722
    %1724 = vmatprep.subr.mxu0 0.0
    %v1725 = vand.u32 %v148, 4294901760
    %v1726 = vsub.f32 %v148, %v1725
    %v1727 = vand.u32 %v1726, 4294901760
    %1728 = vmatpush1.msra.mxu0 %v1727
    %1729 = vmatprep.subr.mxu0 0.0
    %v1730 = vand.u32 %v149, 4294901760
    %v1731 = vsub.f32 %v149, %v1730
    %v1732 = vand.u32 %v1731, 4294901760
    %1733 = vmatpush1.msra.mxu0 %v1732
    %1734 = vmatprep.subr.mxu0 0.0
    %v1735 = vand.u32 %v150, 4294901760
    %v1736 = vsub.f32 %v150, %v1735
    %v1737 = vand.u32 %v1736, 4294901760
    %1738 = vmatpush1.msra.mxu0 %v1737
    %1739 = vmatprep.subr.mxu0 0.0
    %v1740 = vand.u32 %v151, 4294901760
    %v1741 = vsub.f32 %v151, %v1740
    %v1742 = vand.u32 %v1741, 4294901760
    %1743 = vmatpush1.msra.mxu0 %v1742
    %1744 = vmatprep.subr.mxu0 0.0
    %v1745 = vand.u32 %v152, 4294901760
    %v1746 = vsub.f32 %v152, %v1745
    %v1747 = vand.u32 %v1746, 4294901760
    %1748 = vmatpush1.msra.mxu0 %v1747
    %1749 = vmatprep.subr.mxu0 0.0
    %v1750 = vand.u32 %v153, 4294901760
    %v1751 = vsub.f32 %v153, %v1750
    %v1752 = vand.u32 %v1751, 4294901760
    %1753 = vmatpush1.msra.mxu0 %v1752
    %1754 = vmatprep.subr.mxu0 0.0
    %v1755 = vand.u32 %v154, 4294901760
    %v1756 = vsub.f32 %v154, %v1755
    %v1757 = vand.u32 %v1756, 4294901760
    %1758 = vmatpush1.msra.mxu0 %v1757
    %1759 = vmatprep.subr.mxu0 0.0
    %v1760 = vand.u32 %v155, 4294901760
    %v1761 = vsub.f32 %v155, %v1760
    %v1762 = vand.u32 %v1761, 4294901760
    %1763 = vmatpush1.msra.mxu0 %v1762
    %1764 = vmatprep.subr.mxu0 0.0
    %v1765 = vand.u32 %v156, 4294901760
    %v1766 = vsub.f32 %v156, %v1765
    %v1767 = vand.u32 %v1766, 4294901760
    %1768 = vmatpush1.msra.mxu0 %v1767
    %1769 = vmatprep.subr.mxu0 0.0
    %v1770 = vand.u32 %v157, 4294901760
    %v1771 = vsub.f32 %v157, %v1770
    %v1772 = vand.u32 %v1771, 4294901760
    %1773 = vmatpush1.msra.mxu0 %v1772
    %v1774 = vand.u32 %v1023, 4294901760
    %1775 = vmatprep.mubr.f32.mxu0 %v1774
    %v1776 = vand.u32 %v1022, 4294901760
    %1777 = vmatmul.mubr.f32.gmra.mrb[0].mxu0 %v1776
    %v1778 = vpop.f32.mrb[0].mxu0
    %v1779 = vadd.f32 %v1611, %v1778
    %v1780 = vpop.f32.mrb[0].mxu0
    %1781 = vdwg.mxu0
    %1782 = vmatprep.subr.mxu0 0.0
    %v1783 = vand.u32 %v126, 4294901760
    %1784 = vmatpush1.msra.mxu0 %v1783
    %1785 = vmatprep.subr.mxu0 0.0
    %v1786 = vand.u32 %v127, 4294901760
    %1787 = vmatpush1.msra.mxu0 %v1786
    %1788 = vmatprep.subr.mxu0 0.0
    %v1789 = vand.u32 %v128, 4294901760
    %1790 = vmatpush1.msra.mxu0 %v1789
    %1791 = vmatprep.subr.mxu0 0.0
    %v1792 = vand.u32 %v129, 4294901760
    %1793 = vmatpush1.msra.mxu0 %v1792
    %1794 = vmatprep.subr.mxu0 0.0
    %v1795 = vand.u32 %v130, 4294901760
    %1796 = vmatpush1.msra.mxu0 %v1795
    %1797 = vmatprep.subr.mxu0 0.0
    %v1798 = vand.u32 %v131, 4294901760
    %1799 = vmatpush1.msra.mxu0 %v1798
    %1800 = vmatprep.subr.mxu0 0.0
    %v1801 = vand.u32 %v132, 4294901760
    %1802 = vmatpush1.msra.mxu0 %v1801
    %1803 = vmatprep.subr.mxu0 0.0
    %v1804 = vand.u32 %v133, 4294901760
    %1805 = vmatpush1.msra.mxu0 %v1804
    %1806 = vmatprep.subr.mxu0 0.0
    %v1807 = vand.u32 %v134, 4294901760
    %1808 = vmatpush1.msra.mxu0 %v1807
    %1809 = vmatprep.subr.mxu0 0.0
    %v1810 = vand.u32 %v135, 4294901760
    %1811 = vmatpush1.msra.mxu0 %v1810
    %1812 = vmatprep.subr.mxu0 0.0
    %v1813 = vand.u32 %v136, 4294901760
    %1814 = vmatpush1.msra.mxu0 %v1813
    %1815 = vmatprep.subr.mxu0 0.0
    %v1816 = vand.u32 %v137, 4294901760
    %1817 = vmatpush1.msra.mxu0 %v1816
    %1818 = vmatprep.subr.mxu0 0.0
    %v1819 = vand.u32 %v138, 4294901760
    %1820 = vmatpush1.msra.mxu0 %v1819
    %1821 = vmatprep.subr.mxu0 0.0
    %v1822 = vand.u32 %v139, 4294901760
    %1823 = vmatpush1.msra.mxu0 %v1822
    %1824 = vmatprep.subr.mxu0 0.0
    %v1825 = vand.u32 %v140, 4294901760
    %1826 = vmatpush1.msra.mxu0 %v1825
    %1827 = vmatprep.subr.mxu0 0.0
    %v1828 = vand.u32 %v141, 4294901760
    %1829 = vmatpush1.msra.mxu0 %v1828
    %1830 = vmatprep.subr.mxu0 0.0
    %v1831 = vand.u32 %v142, 4294901760
    %1832 = vmatpush1.msra.mxu0 %v1831
    %1833 = vmatprep.subr.mxu0 0.0
    %v1834 = vand.u32 %v143, 4294901760
    %1835 = vmatpush1.msra.mxu0 %v1834
    %1836 = vmatprep.subr.mxu0 0.0
    %v1837 = vand.u32 %v144, 4294901760
    %1838 = vmatpush1.msra.mxu0 %v1837
    %1839 = vmatprep.subr.mxu0 0.0
    %v1840 = vand.u32 %v145, 4294901760
    %1841 = vmatpush1.msra.mxu0 %v1840
    %1842 = vmatprep.subr.mxu0 0.0
    %v1843 = vand.u32 %v146, 4294901760
    %1844 = vmatpush1.msra.mxu0 %v1843
    %1845 = vmatprep.subr.mxu0 0.0
    %v1846 = vand.u32 %v147, 4294901760
    %1847 = vmatpush1.msra.mxu0 %v1846
    %1848 = vmatprep.subr.mxu0 0.0
    %v1849 = vand.u32 %v148, 4294901760
    %1850 = vmatpush1.msra.mxu0 %v1849
    %1851 = vmatprep.subr.mxu0 0.0
    %v1852 = vand.u32 %v149, 4294901760
    %1853 = vmatpush1.msra.mxu0 %v1852
    %1854 = vmatprep.subr.mxu0 0.0
    %v1855 = vand.u32 %v150, 4294901760
    %1856 = vmatpush1.msra.mxu0 %v1855
    %1857 = vmatprep.subr.mxu0 0.0
    %v1858 = vand.u32 %v151, 4294901760
    %1859 = vmatpush1.msra.mxu0 %v1858
    %1860 = vmatprep.subr.mxu0 0.0
    %v1861 = vand.u32 %v152, 4294901760
    %1862 = vmatpush1.msra.mxu0 %v1861
    %1863 = vmatprep.subr.mxu0 0.0
    %v1864 = vand.u32 %v153, 4294901760
    %1865 = vmatpush1.msra.mxu0 %v1864
    %1866 = vmatprep.subr.mxu0 0.0
    %v1867 = vand.u32 %v154, 4294901760
    %1868 = vmatpush1.msra.mxu0 %v1867
    %1869 = vmatprep.subr.mxu0 0.0
    %v1870 = vand.u32 %v155, 4294901760
    %1871 = vmatpush1.msra.mxu0 %v1870
    %1872 = vmatprep.subr.mxu0 0.0
    %v1873 = vand.u32 %v156, 4294901760
    %1874 = vmatpush1.msra.mxu0 %v1873
    %1875 = vmatprep.subr.mxu0 0.0
    %v1876 = vand.u32 %v157, 4294901760
    %1877 = vmatpush1.msra.mxu0 %v1876
    %v1878 = vand.u32 %v1023, 4294901760
    %1879 = vmatprep.mubr.f32.mxu0 %v1878
    %v1880 = vand.u32 %v1022, 4294901760
    %1881 = vmatmul.mubr.f32.gmra.mrb[0].mxu0 %v1880
    %v1882 = vpop.f32.mrb[0].mxu0
    %v1883 = vadd.f32 %v1779, %v1882
    %v1884 = vpop.f32.mrb[0].mxu0
    %1885 = vdwg.mxu0
    %v1886 = vmul.f32 %v70, %v70
    %v1887 = vmul.f32 %v71, %v71
    %1888 = vmatprep.subr.mxu0 0.0
    %v1889 = vand.u32 %v126, 4294901760
    %1890 = vmatpush1.msra.mxu0 %v1889
    %1891 = vmatprep.subr.mxu0 0.0
    %v1892 = vand.u32 %v127, 4294901760
    %1893 = vmatpush1.msra.mxu0 %v1892
    %1894 = vmatprep.subr.mxu0 0.0
    %v1895 = vand.u32 %v128, 4294901760
    %1896 = vmatpush1.msra.mxu0 %v1895
    %1897 = vmatprep.subr.mxu0 0.0
    %v1898 = vand.u32 %v129, 4294901760
    %1899 = vmatpush1.msra.mxu0 %v1898
    %1900 = vmatprep.subr.mxu0 0.0
    %v1901 = vand.u32 %v130, 4294901760
    %1902 = vmatpush1.msra.mxu0 %v1901
    %1903 = vmatprep.subr.mxu0 0.0
    %v1904 = vand.u32 %v131, 4294901760
    %1905 = vmatpush1.msra.mxu0 %v1904
    %1906 = vmatprep.subr.mxu0 0.0
    %v1907 = vand.u32 %v132, 4294901760
    %1908 = vmatpush1.msra.mxu0 %v1907
    %1909 = vmatprep.subr.mxu0 0.0
    %v1910 = vand.u32 %v133, 4294901760
    %1911 = vmatpush1.msra.mxu0 %v1910
    %1912 = vmatprep.subr.mxu0 0.0
    %v1913 = vand.u32 %v134, 4294901760
    %1914 = vmatpush1.msra.mxu0 %v1913
    %1915 = vmatprep.subr.mxu0 0.0
    %v1916 = vand.u32 %v135, 4294901760
    %1917 = vmatpush1.msra.mxu0 %v1916
    %1918 = vmatprep.subr.mxu0 0.0
    %v1919 = vand.u32 %v136, 4294901760
    %1920 = vmatpush1.msra.mxu0 %v1919
    %1921 = vmatprep.subr.mxu0 0.0
    %v1922 = vand.u32 %v137, 4294901760
    %1923 = vmatpush1.msra.mxu0 %v1922
    %1924 = vmatprep.subr.mxu0 0.0
    %v1925 = vand.u32 %v138, 4294901760
    %1926 = vmatpush1.msra.mxu0 %v1925
    %1927 = vmatprep.subr.mxu0 0.0
    %v1928 = vand.u32 %v139, 4294901760
    %1929 = vmatpush1.msra.mxu0 %v1928
    %1930 = vmatprep.subr.mxu0 0.0
    %v1931 = vand.u32 %v140, 4294901760
    %1932 = vmatpush1.msra.mxu0 %v1931
    %1933 = vmatprep.subr.mxu0 0.0
    %v1934 = vand.u32 %v141, 4294901760
    %1935 = vmatpush1.msra.mxu0 %v1934
    %1936 = vmatprep.subr.mxu0 0.0
    %v1937 = vand.u32 %v142, 4294901760
    %1938 = vmatpush1.msra.mxu0 %v1937
    %1939 = vmatprep.subr.mxu0 0.0
    %v1940 = vand.u32 %v143, 4294901760
    %1941 = vmatpush1.msra.mxu0 %v1940
    %1942 = vmatprep.subr.mxu0 0.0
    %v1943 = vand.u32 %v144, 4294901760
    %1944 = vmatpush1.msra.mxu0 %v1943
    %1945 = vmatprep.subr.mxu0 0.0
    %v1946 = vand.u32 %v145, 4294901760
    %1947 = vmatpush1.msra.mxu0 %v1946
    %1948 = vmatprep.subr.mxu0 0.0
    %v1949 = vand.u32 %v146, 4294901760
    %1950 = vmatpush1.msra.mxu0 %v1949
    %1951 = vmatprep.subr.mxu0 0.0
    %v1952 = vand.u32 %v147, 4294901760
    %1953 = vmatpush1.msra.mxu0 %v1952
    %1954 = vmatprep.subr.mxu0 0.0
    %v1955 = vand.u32 %v148, 4294901760
    %1956 = vmatpush1.msra.mxu0 %v1955
    %1957 = vmatprep.subr.mxu0 0.0
    %v1958 = vand.u32 %v149, 4294901760
    %1959 = vmatpush1.msra.mxu0 %v1958
    %1960 = vmatprep.subr.mxu0 0.0
    %v1961 = vand.u32 %v150, 4294901760
    %1962 = vmatpush1.msra.mxu0 %v1961
    %1963 = vmatprep.subr.mxu0 0.0
    %v1964 = vand.u32 %v151, 4294901760
    %1965 = vmatpush1.msra.mxu0 %v1964
    %1966 = vmatprep.subr.mxu0 0.0
    %v1967 = vand.u32 %v152, 4294901760
    %1968 = vmatpush1.msra.mxu0 %v1967
    %1969 = vmatprep.subr.mxu0 0.0
    %v1970 = vand.u32 %v153, 4294901760
    %1971 = vmatpush1.msra.mxu0 %v1970
    %1972 = vmatprep.subr.mxu0 0.0
    %v1973 = vand.u32 %v154, 4294901760
    %1974 = vmatpush1.msra.mxu0 %v1973
    %1975 = vmatprep.subr.mxu0 0.0
    %v1976 = vand.u32 %v155, 4294901760
    %1977 = vmatpush1.msra.mxu0 %v1976
    %1978 = vmatprep.subr.mxu0 0.0
    %v1979 = vand.u32 %v156, 4294901760
    %1980 = vmatpush1.msra.mxu0 %v1979
    %1981 = vmatprep.subr.mxu0 0.0
    %v1982 = vand.u32 %v157, 4294901760
    %1983 = vmatpush1.msra.mxu0 %v1982
    %v1984 = vand.u32 %v1887, 4294901760
    %v1985 = vsub.f32 %v1887, %v1984
    %v1986 = vand.u32 %v1985, 4294901760
    %v1987 = vsub.f32 %v1985, %v1986
    %v1988 = vand.u32 %v1987, 4294901760
    %1989 = vmatprep.mubr.f32.mxu0 %v1988
    %v1990 = vand.u32 %v1886, 4294901760
    %v1991 = vsub.f32 %v1886, %v1990
    %v1992 = vand.u32 %v1991, 4294901760
    %v1993 = vsub.f32 %v1991, %v1992
    %v1994 = vand.u32 %v1993, 4294901760
    %1995 = vmatmul.mubr.f32.gmra.mrb[0].mxu0 %v1994
    %v1996 = vpop.f32.mrb[0].mxu0
    %v1997 = vadd.f32 0.0, %v1996
    %v1998 = vpop.f32.mrb[0].mxu0
    %1999 = vdwg.mxu0
    %2000 = vmatprep.subr.mxu0 0.0
    %v2001 = vand.u32 %v126, 4294901760
    %v2002 = vsub.f32 %v126, %v2001
    %v2003 = vand.u32 %v2002, 4294901760
    %v2004 = vsub.f32 %v2002, %v2003
    %v2005 = vand.u32 %v2004, 4294901760
    %2006 = vmatpush1.msra.mxu0 %v2005
    %2007 = vmatprep.subr.mxu0 0.0
    %v2008 = vand.u32 %v127, 4294901760
    %v2009 = vsub.f32 %v127, %v2008
    %v2010 = vand.u32 %v2009, 4294901760
    %v2011 = vsub.f32 %v2009, %v2010
    %v2012 = vand.u32 %v2011, 4294901760
    %2013 = vmatpush1.msra.mxu0 %v2012
    %2014 = vmatprep.subr.mxu0 0.0
    %v2015 = vand.u32 %v128, 4294901760
    %v2016 = vsub.f32 %v128, %v2015
    %v2017 = vand.u32 %v2016, 4294901760
    %v2018 = vsub.f32 %v2016, %v2017
    %v2019 = vand.u32 %v2018, 4294901760
    %2020 = vmatpush1.msra.mxu0 %v2019
    %2021 = vmatprep.subr.mxu0 0.0
    %v2022 = vand.u32 %v129, 4294901760
    %v2023 = vsub.f32 %v129, %v2022
    %v2024 = vand.u32 %v2023, 4294901760
    %v2025 = vsub.f32 %v2023, %v2024
    %v2026 = vand.u32 %v2025, 4294901760
    %2027 = vmatpush1.msra.mxu0 %v2026
    %2028 = vmatprep.subr.mxu0 0.0
    %v2029 = vand.u32 %v130, 4294901760
    %v2030 = vsub.f32 %v130, %v2029
    %v2031 = vand.u32 %v2030, 4294901760
    %v2032 = vsub.f32 %v2030, %v2031
    %v2033 = vand.u32 %v2032, 4294901760
    %2034 = vmatpush1.msra.mxu0 %v2033
    %2035 = vmatprep.subr.mxu0 0.0
    %v2036 = vand.u32 %v131, 4294901760
    %v2037 = vsub.f32 %v131, %v2036
    %v2038 = vand.u32 %v2037, 4294901760
    %v2039 = vsub.f32 %v2037, %v2038
    %v2040 = vand.u32 %v2039, 4294901760
    %2041 = vmatpush1.msra.mxu0 %v2040
    %2042 = vmatprep.subr.mxu0 0.0
    %v2043 = vand.u32 %v132, 4294901760
    %v2044 = vsub.f32 %v132, %v2043
    %v2045 = vand.u32 %v2044, 4294901760
    %v2046 = vsub.f32 %v2044, %v2045
    %v2047 = vand.u32 %v2046, 4294901760
    %2048 = vmatpush1.msra.mxu0 %v2047
    %2049 = vmatprep.subr.mxu0 0.0
    %v2050 = vand.u32 %v133, 4294901760
    %v2051 = vsub.f32 %v133, %v2050
    %v2052 = vand.u32 %v2051, 4294901760
    %v2053 = vsub.f32 %v2051, %v2052
    %v2054 = vand.u32 %v2053, 4294901760
    %2055 = vmatpush1.msra.mxu0 %v2054
    %2056 = vmatprep.subr.mxu0 0.0
    %v2057 = vand.u32 %v134, 4294901760
    %v2058 = vsub.f32 %v134, %v2057
    %v2059 = vand.u32 %v2058, 4294901760
    %v2060 = vsub.f32 %v2058, %v2059
    %v2061 = vand.u32 %v2060, 4294901760
    %2062 = vmatpush1.msra.mxu0 %v2061
    %2063 = vmatprep.subr.mxu0 0.0
    %v2064 = vand.u32 %v135, 4294901760
    %v2065 = vsub.f32 %v135, %v2064
    %v2066 = vand.u32 %v2065, 4294901760
    %v2067 = vsub.f32 %v2065, %v2066
    %v2068 = vand.u32 %v2067, 4294901760
    %2069 = vmatpush1.msra.mxu0 %v2068
    %2070 = vmatprep.subr.mxu0 0.0
    %v2071 = vand.u32 %v136, 4294901760
    %v2072 = vsub.f32 %v136, %v2071
    %v2073 = vand.u32 %v2072, 4294901760
    %v2074 = vsub.f32 %v2072, %v2073
    %v2075 = vand.u32 %v2074, 4294901760
    %2076 = vmatpush1.msra.mxu0 %v2075
    %2077 = vmatprep.subr.mxu0 0.0
    %v2078 = vand.u32 %v137, 4294901760
    %v2079 = vsub.f32 %v137, %v2078
    %v2080 = vand.u32 %v2079, 4294901760
    %v2081 = vsub.f32 %v2079, %v2080
    %v2082 = vand.u32 %v2081, 4294901760
    %2083 = vmatpush1.msra.mxu0 %v2082
    %2084 = vmatprep.subr.mxu0 0.0
    %v2085 = vand.u32 %v138, 4294901760
    %v2086 = vsub.f32 %v138, %v2085
    %v2087 = vand.u32 %v2086, 4294901760
    %v2088 = vsub.f32 %v2086, %v2087
    %v2089 = vand.u32 %v2088, 4294901760
    %2090 = vmatpush1.msra.mxu0 %v2089
    %2091 = vmatprep.subr.mxu0 0.0
    %v2092 = vand.u32 %v139, 4294901760
    %v2093 = vsub.f32 %v139, %v2092
    %v2094 = vand.u32 %v2093, 4294901760
    %v2095 = vsub.f32 %v2093, %v2094
    %v2096 = vand.u32 %v2095, 4294901760
    %2097 = vmatpush1.msra.mxu0 %v2096
    %2098 = vmatprep.subr.mxu0 0.0
    %v2099 = vand.u32 %v140, 4294901760
    %v2100 = vsub.f32 %v140, %v2099
    %v2101 = vand.u32 %v2100, 4294901760
    %v2102 = vsub.f32 %v2100, %v2101
    %v2103 = vand.u32 %v2102, 4294901760
    %2104 = vmatpush1.msra.mxu0 %v2103
    %2105 = vmatprep.subr.mxu0 0.0
    %v2106 = vand.u32 %v141, 4294901760
    %v2107 = vsub.f32 %v141, %v2106
    %v2108 = vand.u32 %v2107, 4294901760
    %v2109 = vsub.f32 %v2107, %v2108
    %v2110 = vand.u32 %v2109, 4294901760
    %2111 = vmatpush1.msra.mxu0 %v2110
    %2112 = vmatprep.subr.mxu0 0.0
    %v2113 = vand.u32 %v142, 4294901760
    %v2114 = vsub.f32 %v142, %v2113
    %v2115 = vand.u32 %v2114, 4294901760
    %v2116 = vsub.f32 %v2114, %v2115
    %v2117 = vand.u32 %v2116, 4294901760
    %2118 = vmatpush1.msra.mxu0 %v2117
    %2119 = vmatprep.subr.mxu0 0.0
    %v2120 = vand.u32 %v143, 4294901760
    %v2121 = vsub.f32 %v143, %v2120
    %v2122 = vand.u32 %v2121, 4294901760
    %v2123 = vsub.f32 %v2121, %v2122
    %v2124 = vand.u32 %v2123, 4294901760
    %2125 = vmatpush1.msra.mxu0 %v2124
    %2126 = vmatprep.subr.mxu0 0.0
    %v2127 = vand.u32 %v144, 4294901760
    %v2128 = vsub.f32 %v144, %v2127
    %v2129 = vand.u32 %v2128, 4294901760
    %v2130 = vsub.f32 %v2128, %v2129
    %v2131 = vand.u32 %v2130, 4294901760
    %2132 = vmatpush1.msra.mxu0 %v2131
    %2133 = vmatprep.subr.mxu0 0.0
    %v2134 = vand.u32 %v145, 4294901760
    %v2135 = vsub.f32 %v145, %v2134
    %v2136 = vand.u32 %v2135, 4294901760
    %v2137 = vsub.f32 %v2135, %v2136
    %v2138 = vand.u32 %v2137, 4294901760
    %2139 = vmatpush1.msra.mxu0 %v2138
    %2140 = vmatprep.subr.mxu0 0.0
    %v2141 = vand.u32 %v146, 4294901760
    %v2142 = vsub.f32 %v146, %v2141
    %v2143 = vand.u32 %v2142, 4294901760
    %v2144 = vsub.f32 %v2142, %v2143
    %v2145 = vand.u32 %v2144, 4294901760
    %2146 = vmatpush1.msra.mxu0 %v2145
    %2147 = vmatprep.subr.mxu0 0.0
    %v2148 = vand.u32 %v147, 4294901760
    %v2149 = vsub.f32 %v147, %v2148
    %v2150 = vand.u32 %v2149, 4294901760
    %v2151 = vsub.f32 %v2149, %v2150
    %v2152 = vand.u32 %v2151, 4294901760
    %2153 = vmatpush1.msra.mxu0 %v2152
    %2154 = vmatprep.subr.mxu0 0.0
    %v2155 = vand.u32 %v148, 4294901760
    %v2156 = vsub.f32 %v148, %v2155
    %v2157 = vand.u32 %v2156, 4294901760
    %v2158 = vsub.f32 %v2156, %v2157
    %v2159 = vand.u32 %v2158, 4294901760
    %2160 = vmatpush1.msra.mxu0 %v2159
    %2161 = vmatprep.subr.mxu0 0.0
    %v2162 = vand.u32 %v149, 4294901760
    %v2163 = vsub.f32 %v149, %v2162
    %v2164 = vand.u32 %v2163, 4294901760
    %v2165 = vsub.f32 %v2163, %v2164
    %v2166 = vand.u32 %v2165, 4294901760
    %2167 = vmatpush1.msra.mxu0 %v2166
    %2168 = vmatprep.subr.mxu0 0.0
    %v2169 = vand.u32 %v150, 4294901760
    %v2170 = vsub.f32 %v150, %v2169
    %v2171 = vand.u32 %v2170, 4294901760
    %v2172 = vsub.f32 %v2170, %v2171
    %v2173 = vand.u32 %v2172, 4294901760
    %2174 = vmatpush1.msra.mxu0 %v2173
    %2175 = vmatprep.subr.mxu0 0.0
    %v2176 = vand.u32 %v151, 4294901760
    %v2177 = vsub.f32 %v151, %v2176
    %v2178 = vand.u32 %v2177, 4294901760
    %v2179 = vsub.f32 %v2177, %v2178
    %v2180 = vand.u32 %v2179, 4294901760
    %2181 = vmatpush1.msra.mxu0 %v2180
    %2182 = vmatprep.subr.mxu0 0.0
    %v2183 = vand.u32 %v152, 4294901760
    %v2184 = vsub.f32 %v152, %v2183
    %v2185 = vand.u32 %v2184, 4294901760
    %v2186 = vsub.f32 %v2184, %v2185
    %v2187 = vand.u32 %v2186, 4294901760
    %2188 = vmatpush1.msra.mxu0 %v2187
    %2189 = vmatprep.subr.mxu0 0.0
    %v2190 = vand.u32 %v153, 4294901760
    %v2191 = vsub.f32 %v153, %v2190
    %v2192 = vand.u32 %v2191, 4294901760
    %v2193 = vsub.f32 %v2191, %v2192
    %v2194 = vand.u32 %v2193, 4294901760
    %2195 = vmatpush1.msra.mxu0 %v2194
    %2196 = vmatprep.subr.mxu0 0.0
    %v2197 = vand.u32 %v154, 4294901760
    %v2198 = vsub.f32 %v154, %v2197
    %v2199 = vand.u32 %v2198, 4294901760
    %v2200 = vsub.f32 %v2198, %v2199
    %v2201 = vand.u32 %v2200, 4294901760
    %2202 = vmatpush1.msra.mxu0 %v2201
    %2203 = vmatprep.subr.mxu0 0.0
    %v2204 = vand.u32 %v155, 4294901760
    %v2205 = vsub.f32 %v155, %v2204
    %v2206 = vand.u32 %v2205, 4294901760
    %v2207 = vsub.f32 %v2205, %v2206
    %v2208 = vand.u32 %v2207, 4294901760
    %2209 = vmatpush1.msra.mxu0 %v2208
    %2210 = vmatprep.subr.mxu0 0.0
    %v2211 = vand.u32 %v156, 4294901760
    %v2212 = vsub.f32 %v156, %v2211
    %v2213 = vand.u32 %v2212, 4294901760
    %v2214 = vsub.f32 %v2212, %v2213
    %v2215 = vand.u32 %v2214, 4294901760
    %2216 = vmatpush1.msra.mxu0 %v2215
    %2217 = vmatprep.subr.mxu0 0.0
    %v2218 = vand.u32 %v157, 4294901760
    %v2219 = vsub.f32 %v157, %v2218
    %v2220 = vand.u32 %v2219, 4294901760
    %v2221 = vsub.f32 %v2219, %v2220
    %v2222 = vand.u32 %v2221, 4294901760
    %2223 = vmatpush1.msra.mxu0 %v2222
    %v2224 = vand.u32 %v1887, 4294901760
    %2225 = vmatprep.mubr.f32.mxu0 %v2224
    %v2226 = vand.u32 %v1886, 4294901760
    %2227 = vmatmul.mubr.f32.gmra.mrb[0].mxu0 %v2226
    %v2228 = vpop.f32.mrb[0].mxu0
    %v2229 = vadd.f32 %v1997, %v2228
    %v2230 = vpop.f32.mrb[0].mxu0
    %2231 = vdwg.mxu0
    %2232 = vmatprep.subr.mxu0 0.0
    %v2233 = vand.u32 %v126, 4294901760
    %v2234 = vsub.f32 %v126, %v2233
    %2235 = vmatpush1.msra.mxu0 %v2234
    %2236 = vmatprep.subr.mxu0 0.0
    %v2237 = vand.u32 %v127, 4294901760
    %v2238 = vsub.f32 %v127, %v2237
    %2239 = vmatpush1.msra.mxu0 %v2238
    %2240 = vmatprep.subr.mxu0 0.0
    %v2241 = vand.u32 %v128, 4294901760
    %v2242 = vsub.f32 %v128, %v2241
    %2243 = vmatpush1.msra.mxu0 %v2242
    %2244 = vmatprep.subr.mxu0 0.0
    %v2245 = vand.u32 %v129, 4294901760
    %v2246 = vsub.f32 %v129, %v2245
    %2247 = vmatpush1.msra.mxu0 %v2246
    %2248 = vmatprep.subr.mxu0 0.0
    %v2249 = vand.u32 %v130, 4294901760
    %v2250 = vsub.f32 %v130, %v2249
    %2251 = vmatpush1.msra.mxu0 %v2250
    %2252 = vmatprep.subr.mxu0 0.0
    %v2253 = vand.u32 %v131, 4294901760
    %v2254 = vsub.f32 %v131, %v2253
    %2255 = vmatpush1.msra.mxu0 %v2254
    %2256 = vmatprep.subr.mxu0 0.0
    %v2257 = vand.u32 %v132, 4294901760
    %v2258 = vsub.f32 %v132, %v2257
    %2259 = vmatpush1.msra.mxu0 %v2258
    %2260 = vmatprep.subr.mxu0 0.0
    %v2261 = vand.u32 %v133, 4294901760
    %v2262 = vsub.f32 %v133, %v2261
    %2263 = vmatpush1.msra.mxu0 %v2262
    %2264 = vmatprep.subr.mxu0 0.0
    %v2265 = vand.u32 %v134, 4294901760
    %v2266 = vsub.f32 %v134, %v2265
    %2267 = vmatpush1.msra.mxu0 %v2266
    %2268 = vmatprep.subr.mxu0 0.0
    %v2269 = vand.u32 %v135, 4294901760
    %v2270 = vsub.f32 %v135, %v2269
    %2271 = vmatpush1.msra.mxu0 %v2270
    %2272 = vmatprep.subr.mxu0 0.0
    %v2273 = vand.u32 %v136, 4294901760
    %v2274 = vsub.f32 %v136, %v2273
    %2275 = vmatpush1.msra.mxu0 %v2274
    %2276 = vmatprep.subr.mxu0 0.0
    %v2277 = vand.u32 %v137, 4294901760
    %v2278 = vsub.f32 %v137, %v2277
    %2279 = vmatpush1.msra.mxu0 %v2278
    %2280 = vmatprep.subr.mxu0 0.0
    %v2281 = vand.u32 %v138, 4294901760
    %v2282 = vsub.f32 %v138, %v2281
    %2283 = vmatpush1.msra.mxu0 %v2282
    %2284 = vmatprep.subr.mxu0 0.0
    %v2285 = vand.u32 %v139, 4294901760
    %v2286 = vsub.f32 %v139, %v2285
    %2287 = vmatpush1.msra.mxu0 %v2286
    %2288 = vmatprep.subr.mxu0 0.0
    %v2289 = vand.u32 %v140, 4294901760
    %v2290 = vsub.f32 %v140, %v2289
    %2291 = vmatpush1.msra.mxu0 %v2290
    %2292 = vmatprep.subr.mxu0 0.0
    %v2293 = vand.u32 %v141, 4294901760
    %v2294 = vsub.f32 %v141, %v2293
    %2295 = vmatpush1.msra.mxu0 %v2294
    %2296 = vmatprep.subr.mxu0 0.0
    %v2297 = vand.u32 %v142, 4294901760
    %v2298 = vsub.f32 %v142, %v2297
    %2299 = vmatpush1.msra.mxu0 %v2298
    %2300 = vmatprep.subr.mxu0 0.0
    %v2301 = vand.u32 %v143, 4294901760
    %v2302 = vsub.f32 %v143, %v2301
    %2303 = vmatpush1.msra.mxu0 %v2302
    %2304 = vmatprep.subr.mxu0 0.0
    %v2305 = vand.u32 %v144, 4294901760
    %v2306 = vsub.f32 %v144, %v2305
    %2307 = vmatpush1.msra.mxu0 %v2306
    %2308 = vmatprep.subr.mxu0 0.0
    %v2309 = vand.u32 %v145, 4294901760
    %v2310 = vsub.f32 %v145, %v2309
    %2311 = vmatpush1.msra.mxu0 %v2310
    %2312 = vmatprep.subr.mxu0 0.0
    %v2313 = vand.u32 %v146, 4294901760
    %v2314 = vsub.f32 %v146, %v2313
    %2315 = vmatpush1.msra.mxu0 %v2314
    %2316 = vmatprep.subr.mxu0 0.0
    %v2317 = vand.u32 %v147, 4294901760
    %v2318 = vsub.f32 %v147, %v2317
    %2319 = vmatpush1.msra.mxu0 %v2318
    %2320 = vmatprep.subr.mxu0 0.0
    %v2321 = vand.u32 %v148, 4294901760
    %v2322 = vsub.f32 %v148, %v2321
    %2323 = vmatpush1.msra.mxu0 %v2322
    %2324 = vmatprep.subr.mxu0 0.0
    %v2325 = vand.u32 %v149, 4294901760
    %v2326 = vsub.f32 %v149, %v2325
    %2327 = vmatpush1.msra.mxu0 %v2326
    %2328 = vmatprep.subr.mxu0 0.0
    %v2329 = vand.u32 %v150, 4294901760
    %v2330 = vsub.f32 %v150, %v2329
    %2331 = vmatpush1.msra.mxu0 %v2330
    %2332 = vmatprep.subr.mxu0 0.0
    %v2333 = vand.u32 %v151, 4294901760
    %v2334 = vsub.f32 %v151, %v2333
    %2335 = vmatpush1.msra.mxu0 %v2334
    %2336 = vmatprep.subr.mxu0 0.0
    %v2337 = vand.u32 %v152, 4294901760
    %v2338 = vsub.f32 %v152, %v2337
    %2339 = vmatpush1.msra.mxu0 %v2338
    %2340 = vmatprep.subr.mxu0 0.0
    %v2341 = vand.u32 %v153, 4294901760
    %v2342 = vsub.f32 %v153, %v2341
    %2343 = vmatpush1.msra.mxu0 %v2342
    %2344 = vmatprep.subr.mxu0 0.0
    %v2345 = vand.u32 %v154, 4294901760
    %v2346 = vsub.f32 %v154, %v2345
    %2347 = vmatpush1.msra.mxu0 %v2346
    %2348 = vmatprep.subr.mxu0 0.0
    %v2349 = vand.u32 %v155, 4294901760
    %v2350 = vsub.f32 %v155, %v2349
    %2351 = vmatpush1.msra.mxu0 %v2350
    %2352 = vmatprep.subr.mxu0 0.0
    %v2353 = vand.u32 %v156, 4294901760
    %v2354 = vsub.f32 %v156, %v2353
    %2355 = vmatpush1.msra.mxu0 %v2354
    %2356 = vmatprep.subr.mxu0 0.0
    %v2357 = vand.u32 %v157, 4294901760
    %v2358 = vsub.f32 %v157, %v2357
    %2359 = vmatpush1.msra.mxu0 %v2358
    %v2360 = vand.u32 %v1887, 4294901760
    %v2361 = vsub.f32 %v1887, %v2360
    %2362 = vmatprep.mubr.f32.mxu0 %v2361
    %v2363 = vand.u32 %v1886, 4294901760
    %v2364 = vsub.f32 %v1886, %v2363
    %2365 = vmatmul.mubr.f32.gmra.mrb[0].mxu0 %v2364
    %v2366 = vpop.f32.mrb[0].mxu0
    %v2367 = vadd.f32 %v2229, %v2366
    %v2368 = vpop.f32.mrb[0].mxu0
    %2369 = vdwg.mxu0
    %2370 = vmatprep.subr.mxu0 0.0
    %v2371 = vand.u32 %v126, 4294901760
    %2372 = vmatpush1.msra.mxu0 %v2371
    %2373 = vmatprep.subr.mxu0 0.0
    %v2374 = vand.u32 %v127, 4294901760
    %2375 = vmatpush1.msra.mxu0 %v2374
    %2376 = vmatprep.subr.mxu0 0.0
    %v2377 = vand.u32 %v128, 4294901760
    %2378 = vmatpush1.msra.mxu0 %v2377
    %2379 = vmatprep.subr.mxu0 0.0
    %v2380 = vand.u32 %v129, 4294901760
    %2381 = vmatpush1.msra.mxu0 %v2380
    %2382 = vmatprep.subr.mxu0 0.0
    %v2383 = vand.u32 %v130, 4294901760
    %2384 = vmatpush1.msra.mxu0 %v2383
    %2385 = vmatprep.subr.mxu0 0.0
    %v2386 = vand.u32 %v131, 4294901760
    %2387 = vmatpush1.msra.mxu0 %v2386
    %2388 = vmatprep.subr.mxu0 0.0
    %v2389 = vand.u32 %v132, 4294901760
    %2390 = vmatpush1.msra.mxu0 %v2389
    %2391 = vmatprep.subr.mxu0 0.0
    %v2392 = vand.u32 %v133, 4294901760
    %2393 = vmatpush1.msra.mxu0 %v2392
    %2394 = vmatprep.subr.mxu0 0.0
    %v2395 = vand.u32 %v134, 4294901760
    %2396 = vmatpush1.msra.mxu0 %v2395
    %2397 = vmatprep.subr.mxu0 0.0
    %v2398 = vand.u32 %v135, 4294901760
    %2399 = vmatpush1.msra.mxu0 %v2398
    %2400 = vmatprep.subr.mxu0 0.0
    %v2401 = vand.u32 %v136, 4294901760
    %2402 = vmatpush1.msra.mxu0 %v2401
    %2403 = vmatprep.subr.mxu0 0.0
    %v2404 = vand.u32 %v137, 4294901760
    %2405 = vmatpush1.msra.mxu0 %v2404
    %2406 = vmatprep.subr.mxu0 0.0
    %v2407 = vand.u32 %v138, 4294901760
    %2408 = vmatpush1.msra.mxu0 %v2407
    %2409 = vmatprep.subr.mxu0 0.0
    %v2410 = vand.u32 %v139, 4294901760
    %2411 = vmatpush1.msra.mxu0 %v2410
    %2412 = vmatprep.subr.mxu0 0.0
    %v2413 = vand.u32 %v140, 4294901760
    %2414 = vmatpush1.msra.mxu0 %v2413
    %2415 = vmatprep.subr.mxu0 0.0
    %v2416 = vand.u32 %v141, 4294901760
    %2417 = vmatpush1.msra.mxu0 %v2416
    %2418 = vmatprep.subr.mxu0 0.0
    %v2419 = vand.u32 %v142, 4294901760
    %2420 = vmatpush1.msra.mxu0 %v2419
    %2421 = vmatprep.subr.mxu0 0.0
    %v2422 = vand.u32 %v143, 4294901760
    %2423 = vmatpush1.msra.mxu0 %v2422
    %2424 = vmatprep.subr.mxu0 0.0
    %v2425 = vand.u32 %v144, 4294901760
    %2426 = vmatpush1.msra.mxu0 %v2425
    %2427 = vmatprep.subr.mxu0 0.0
    %v2428 = vand.u32 %v145, 4294901760
    %2429 = vmatpush1.msra.mxu0 %v2428
    %2430 = vmatprep.subr.mxu0 0.0
    %v2431 = vand.u32 %v146, 4294901760
    %2432 = vmatpush1.msra.mxu0 %v2431
    %2433 = vmatprep.subr.mxu0 0.0
    %v2434 = vand.u32 %v147, 4294901760
    %2435 = vmatpush1.msra.mxu0 %v2434
    %2436 = vmatprep.subr.mxu0 0.0
    %v2437 = vand.u32 %v148, 4294901760
    %2438 = vmatpush1.msra.mxu0 %v2437
    %2439 = vmatprep.subr.mxu0 0.0
    %v2440 = vand.u32 %v149, 4294901760
    %2441 = vmatpush1.msra.mxu0 %v2440
    %2442 = vmatprep.subr.mxu0 0.0
    %v2443 = vand.u32 %v150, 4294901760
    %2444 = vmatpush1.msra.mxu0 %v2443
    %2445 = vmatprep.subr.mxu0 0.0
    %v2446 = vand.u32 %v151, 4294901760
    %2447 = vmatpush1.msra.mxu0 %v2446
    %2448 = vmatprep.subr.mxu0 0.0
    %v2449 = vand.u32 %v152, 4294901760
    %2450 = vmatpush1.msra.mxu0 %v2449
    %2451 = vmatprep.subr.mxu0 0.0
    %v2452 = vand.u32 %v153, 4294901760
    %2453 = vmatpush1.msra.mxu0 %v2452
    %2454 = vmatprep.subr.mxu0 0.0
    %v2455 = vand.u32 %v154, 4294901760
    %2456 = vmatpush1.msra.mxu0 %v2455
    %2457 = vmatprep.subr.mxu0 0.0
    %v2458 = vand.u32 %v155, 4294901760
    %2459 = vmatpush1.msra.mxu0 %v2458
    %2460 = vmatprep.subr.mxu0 0.0
    %v2461 = vand.u32 %v156, 4294901760
    %2462 = vmatpush1.msra.mxu0 %v2461
    %2463 = vmatprep.subr.mxu0 0.0
    %v2464 = vand.u32 %v157, 4294901760
    %2465 = vmatpush1.msra.mxu0 %v2464
    %v2466 = vand.u32 %v1887, 4294901760
    %v2467 = vsub.f32 %v1887, %v2466
    %v2468 = vand.u32 %v2467, 4294901760
    %2469 = vmatprep.mubr.f32.mxu0 %v2468
    %v2470 = vand.u32 %v1886, 4294901760
    %v2471 = vsub.f32 %v1886, %v2470
    %v2472 = vand.u32 %v2471, 4294901760
    %2473 = vmatmul.mubr.f32.gmra.mrb[0].mxu0 %v2472
    %v2474 = vpop.f32.mrb[0].mxu0
    %v2475 = vadd.f32 %v2367, %v2474
    %v2476 = vpop.f32.mrb[0].mxu0
    %2477 = vdwg.mxu0
    %2478 = vmatprep.subr.mxu0 0.0
    %v2479 = vand.u32 %v126, 4294901760
    %v2480 = vsub.f32 %v126, %v2479
    %v2481 = vand.u32 %v2480, 4294901760
    %2482 = vmatpush1.msra.mxu0 %v2481
    %2483 = vmatprep.subr.mxu0 0.0
    %v2484 = vand.u32 %v127, 4294901760
    %v2485 = vsub.f32 %v127, %v2484
    %v2486 = vand.u32 %v2485, 4294901760
    %2487 = vmatpush1.msra.mxu0 %v2486
    %2488 = vmatprep.subr.mxu0 0.0
    %v2489 = vand.u32 %v128, 4294901760
    %v2490 = vsub.f32 %v128, %v2489
    %v2491 = vand.u32 %v2490, 4294901760
    %2492 = vmatpush1.msra.mxu0 %v2491
    %2493 = vmatprep.subr.mxu0 0.0
    %v2494 = vand.u32 %v129, 4294901760
    %v2495 = vsub.f32 %v129, %v2494
    %v2496 = vand.u32 %v2495, 4294901760
    %2497 = vmatpush1.msra.mxu0 %v2496
    %2498 = vmatprep.subr.mxu0 0.0
    %v2499 = vand.u32 %v130, 4294901760
    %v2500 = vsub.f32 %v130, %v2499
    %v2501 = vand.u32 %v2500, 4294901760
    %2502 = vmatpush1.msra.mxu0 %v2501
    %2503 = vmatprep.subr.mxu0 0.0
    %v2504 = vand.u32 %v131, 4294901760
    %v2505 = vsub.f32 %v131, %v2504
    %v2506 = vand.u32 %v2505, 4294901760
    %2507 = vmatpush1.msra.mxu0 %v2506
    %2508 = vmatprep.subr.mxu0 0.0
    %v2509 = vand.u32 %v132, 4294901760
    %v2510 = vsub.f32 %v132, %v2509
    %v2511 = vand.u32 %v2510, 4294901760
    %2512 = vmatpush1.msra.mxu0 %v2511
    %2513 = vmatprep.subr.mxu0 0.0
    %v2514 = vand.u32 %v133, 4294901760
    %v2515 = vsub.f32 %v133, %v2514
    %v2516 = vand.u32 %v2515, 4294901760
    %2517 = vmatpush1.msra.mxu0 %v2516
    %2518 = vmatprep.subr.mxu0 0.0
    %v2519 = vand.u32 %v134, 4294901760
    %v2520 = vsub.f32 %v134, %v2519
    %v2521 = vand.u32 %v2520, 4294901760
    %2522 = vmatpush1.msra.mxu0 %v2521
    %2523 = vmatprep.subr.mxu0 0.0
    %v2524 = vand.u32 %v135, 4294901760
    %v2525 = vsub.f32 %v135, %v2524
    %v2526 = vand.u32 %v2525, 4294901760
    %2527 = vmatpush1.msra.mxu0 %v2526
    %2528 = vmatprep.subr.mxu0 0.0
    %v2529 = vand.u32 %v136, 4294901760
    %v2530 = vsub.f32 %v136, %v2529
    %v2531 = vand.u32 %v2530, 4294901760
    %2532 = vmatpush1.msra.mxu0 %v2531
    %2533 = vmatprep.subr.mxu0 0.0
    %v2534 = vand.u32 %v137, 4294901760
    %v2535 = vsub.f32 %v137, %v2534
    %v2536 = vand.u32 %v2535, 4294901760
    %2537 = vmatpush1.msra.mxu0 %v2536
    %2538 = vmatprep.subr.mxu0 0.0
    %v2539 = vand.u32 %v138, 4294901760
    %v2540 = vsub.f32 %v138, %v2539
    %v2541 = vand.u32 %v2540, 4294901760
    %2542 = vmatpush1.msra.mxu0 %v2541
    %2543 = vmatprep.subr.mxu0 0.0
    %v2544 = vand.u32 %v139, 4294901760
    %v2545 = vsub.f32 %v139, %v2544
    %v2546 = vand.u32 %v2545, 4294901760
    %2547 = vmatpush1.msra.mxu0 %v2546
    %2548 = vmatprep.subr.mxu0 0.0
    %v2549 = vand.u32 %v140, 4294901760
    %v2550 = vsub.f32 %v140, %v2549
    %v2551 = vand.u32 %v2550, 4294901760
    %2552 = vmatpush1.msra.mxu0 %v2551
    %2553 = vmatprep.subr.mxu0 0.0
    %v2554 = vand.u32 %v141, 4294901760
    %v2555 = vsub.f32 %v141, %v2554
    %v2556 = vand.u32 %v2555, 4294901760
    %2557 = vmatpush1.msra.mxu0 %v2556
    %2558 = vmatprep.subr.mxu0 0.0
    %v2559 = vand.u32 %v142, 4294901760
    %v2560 = vsub.f32 %v142, %v2559
    %v2561 = vand.u32 %v2560, 4294901760
    %2562 = vmatpush1.msra.mxu0 %v2561
    %2563 = vmatprep.subr.mxu0 0.0
    %v2564 = vand.u32 %v143, 4294901760
    %v2565 = vsub.f32 %v143, %v2564
    %v2566 = vand.u32 %v2565, 4294901760
    %2567 = vmatpush1.msra.mxu0 %v2566
    %2568 = vmatprep.subr.mxu0 0.0
    %v2569 = vand.u32 %v144, 4294901760
    %v2570 = vsub.f32 %v144, %v2569
    %v2571 = vand.u32 %v2570, 4294901760
    %2572 = vmatpush1.msra.mxu0 %v2571
    %2573 = vmatprep.subr.mxu0 0.0
    %v2574 = vand.u32 %v145, 4294901760
    %v2575 = vsub.f32 %v145, %v2574
    %v2576 = vand.u32 %v2575, 4294901760
    %2577 = vmatpush1.msra.mxu0 %v2576
    %2578 = vmatprep.subr.mxu0 0.0
    %v2579 = vand.u32 %v146, 4294901760
    %v2580 = vsub.f32 %v146, %v2579
    %v2581 = vand.u32 %v2580, 4294901760
    %2582 = vmatpush1.msra.mxu0 %v2581
    %2583 = vmatprep.subr.mxu0 0.0
    %v2584 = vand.u32 %v147, 4294901760
    %v2585 = vsub.f32 %v147, %v2584
    %v2586 = vand.u32 %v2585, 4294901760
    %2587 = vmatpush1.msra.mxu0 %v2586
    %2588 = vmatprep.subr.mxu0 0.0
    %v2589 = vand.u32 %v148, 4294901760
    %v2590 = vsub.f32 %v148, %v2589
    %v2591 = vand.u32 %v2590, 4294901760
    %2592 = vmatpush1.msra.mxu0 %v2591
    %2593 = vmatprep.subr.mxu0 0.0
    %v2594 = vand.u32 %v149, 4294901760
    %v2595 = vsub.f32 %v149, %v2594
    %v2596 = vand.u32 %v2595, 4294901760
    %2597 = vmatpush1.msra.mxu0 %v2596
    %2598 = vmatprep.subr.mxu0 0.0
    %v2599 = vand.u32 %v150, 4294901760
    %v2600 = vsub.f32 %v150, %v2599
    %v2601 = vand.u32 %v2600, 4294901760
    %2602 = vmatpush1.msra.mxu0 %v2601
    %2603 = vmatprep.subr.mxu0 0.0
    %v2604 = vand.u32 %v151, 4294901760
    %v2605 = vsub.f32 %v151, %v2604
    %v2606 = vand.u32 %v2605, 4294901760
    %2607 = vmatpush1.msra.mxu0 %v2606
    %2608 = vmatprep.subr.mxu0 0.0
    %v2609 = vand.u32 %v152, 4294901760
    %v2610 = vsub.f32 %v152, %v2609
    %v2611 = vand.u32 %v2610, 4294901760
    %2612 = vmatpush1.msra.mxu0 %v2611
    %2613 = vmatprep.subr.mxu0 0.0
    %v2614 = vand.u32 %v153, 4294901760
    %v2615 = vsub.f32 %v153, %v2614
    %v2616 = vand.u32 %v2615, 4294901760
    %2617 = vmatpush1.msra.mxu0 %v2616
    %2618 = vmatprep.subr.mxu0 0.0
    %v2619 = vand.u32 %v154, 4294901760
    %v2620 = vsub.f32 %v154, %v2619
    %v2621 = vand.u32 %v2620, 4294901760
    %2622 = vmatpush1.msra.mxu0 %v2621
    %2623 = vmatprep.subr.mxu0 0.0
    %v2624 = vand.u32 %v155, 4294901760
    %v2625 = vsub.f32 %v155, %v2624
    %v2626 = vand.u32 %v2625, 4294901760
    %2627 = vmatpush1.msra.mxu0 %v2626
    %2628 = vmatprep.subr.mxu0 0.0
    %v2629 = vand.u32 %v156, 4294901760
    %v2630 = vsub.f32 %v156, %v2629
    %v2631 = vand.u32 %v2630, 4294901760
    %2632 = vmatpush1.msra.mxu0 %v2631
    %2633 = vmatprep.subr.mxu0 0.0
    %v2634 = vand.u32 %v157, 4294901760
    %v2635 = vsub.f32 %v157, %v2634
    %v2636 = vand.u32 %v2635, 4294901760
    %2637 = vmatpush1.msra.mxu0 %v2636
    %v2638 = vand.u32 %v1887, 4294901760
    %2639 = vmatprep.mubr.f32.mxu0 %v2638
    %v2640 = vand.u32 %v1886, 4294901760
    %2641 = vmatmul.mubr.f32.gmra.mrb[0].mxu0 %v2640
    %v2642 = vpop.f32.mrb[0].mxu0
    %v2643 = vadd.f32 %v2475, %v2642
    %v2644 = vpop.f32.mrb[0].mxu0
    %2645 = vdwg.mxu0
    %2646 = vmatprep.subr.mxu0 0.0
    %v2647 = vand.u32 %v126, 4294901760
    %2648 = vmatpush1.msra.mxu0 %v2647
    %2649 = vmatprep.subr.mxu0 0.0
    %v2650 = vand.u32 %v127, 4294901760
    %2651 = vmatpush1.msra.mxu0 %v2650
    %2652 = vmatprep.subr.mxu0 0.0
    %v2653 = vand.u32 %v128, 4294901760
    %2654 = vmatpush1.msra.mxu0 %v2653
    %2655 = vmatprep.subr.mxu0 0.0
    %v2656 = vand.u32 %v129, 4294901760
    %2657 = vmatpush1.msra.mxu0 %v2656
    %2658 = vmatprep.subr.mxu0 0.0
    %v2659 = vand.u32 %v130, 4294901760
    %2660 = vmatpush1.msra.mxu0 %v2659
    %2661 = vmatprep.subr.mxu0 0.0
    %v2662 = vand.u32 %v131, 4294901760
    %2663 = vmatpush1.msra.mxu0 %v2662
    %2664 = vmatprep.subr.mxu0 0.0
    %v2665 = vand.u32 %v132, 4294901760
    %2666 = vmatpush1.msra.mxu0 %v2665
    %2667 = vmatprep.subr.mxu0 0.0
    %v2668 = vand.u32 %v133, 4294901760
    %2669 = vmatpush1.msra.mxu0 %v2668
    %2670 = vmatprep.subr.mxu0 0.0
    %v2671 = vand.u32 %v134, 4294901760
    %2672 = vmatpush1.msra.mxu0 %v2671
    %2673 = vmatprep.subr.mxu0 0.0
    %v2674 = vand.u32 %v135, 4294901760
    %2675 = vmatpush1.msra.mxu0 %v2674
    %2676 = vmatprep.subr.mxu0 0.0
    %v2677 = vand.u32 %v136, 4294901760
    %2678 = vmatpush1.msra.mxu0 %v2677
    %2679 = vmatprep.subr.mxu0 0.0
    %v2680 = vand.u32 %v137, 4294901760
    %2681 = vmatpush1.msra.mxu0 %v2680
    %2682 = vmatprep.subr.mxu0 0.0
    %v2683 = vand.u32 %v138, 4294901760
    %2684 = vmatpush1.msra.mxu0 %v2683
    %2685 = vmatprep.subr.mxu0 0.0
    %v2686 = vand.u32 %v139, 4294901760
    %2687 = vmatpush1.msra.mxu0 %v2686
    %2688 = vmatprep.subr.mxu0 0.0
    %v2689 = vand.u32 %v140, 4294901760
    %2690 = vmatpush1.msra.mxu0 %v2689
    %2691 = vmatprep.subr.mxu0 0.0
    %v2692 = vand.u32 %v141, 4294901760
    %2693 = vmatpush1.msra.mxu0 %v2692
    %2694 = vmatprep.subr.mxu0 0.0
    %v2695 = vand.u32 %v142, 4294901760
    %2696 = vmatpush1.msra.mxu0 %v2695
    %2697 = vmatprep.subr.mxu0 0.0
    %v2698 = vand.u32 %v143, 4294901760
    %2699 = vmatpush1.msra.mxu0 %v2698
    %2700 = vmatprep.subr.mxu0 0.0
    %v2701 = vand.u32 %v144, 4294901760
    %2702 = vmatpush1.msra.mxu0 %v2701
    %2703 = vmatprep.subr.mxu0 0.0
    %v2704 = vand.u32 %v145, 4294901760
    %2705 = vmatpush1.msra.mxu0 %v2704
    %2706 = vmatprep.subr.mxu0 0.0
    %v2707 = vand.u32 %v146, 4294901760
    %2708 = vmatpush1.msra.mxu0 %v2707
    %2709 = vmatprep.subr.mxu0 0.0
    %v2710 = vand.u32 %v147, 4294901760
    %2711 = vmatpush1.msra.mxu0 %v2710
    %2712 = vmatprep.subr.mxu0 0.0
    %v2713 = vand.u32 %v148, 4294901760
    %2714 = vmatpush1.msra.mxu0 %v2713
    %2715 = vmatprep.subr.mxu0 0.0
    %v2716 = vand.u32 %v149, 4294901760
    %2717 = vmatpush1.msra.mxu0 %v2716
    %2718 = vmatprep.subr.mxu0 0.0
    %v2719 = vand.u32 %v150, 4294901760
    %2720 = vmatpush1.msra.mxu0 %v2719
    %2721 = vmatprep.subr.mxu0 0.0
    %v2722 = vand.u32 %v151, 4294901760
    %2723 = vmatpush1.msra.mxu0 %v2722
    %2724 = vmatprep.subr.mxu0 0.0
    %v2725 = vand.u32 %v152, 4294901760
    %2726 = vmatpush1.msra.mxu0 %v2725
    %2727 = vmatprep.subr.mxu0 0.0
    %v2728 = vand.u32 %v153, 4294901760
    %2729 = vmatpush1.msra.mxu0 %v2728
    %2730 = vmatprep.subr.mxu0 0.0
    %v2731 = vand.u32 %v154, 4294901760
    %2732 = vmatpush1.msra.mxu0 %v2731
    %2733 = vmatprep.subr.mxu0 0.0
    %v2734 = vand.u32 %v155, 4294901760
    %2735 = vmatpush1.msra.mxu0 %v2734
    %2736 = vmatprep.subr.mxu0 0.0
    %v2737 = vand.u32 %v156, 4294901760
    %2738 = vmatpush1.msra.mxu0 %v2737
    %2739 = vmatprep.subr.mxu0 0.0
    %v2740 = vand.u32 %v157, 4294901760
    %2741 = vmatpush1.msra.mxu0 %v2740
    %v2742 = vand.u32 %v1887, 4294901760
    %2743 = vmatprep.mubr.f32.mxu0 %v2742
    %v2744 = vand.u32 %v1886, 4294901760
    %2745 = vmatmul.mubr.f32.gmra.mrb[0].mxu0 %v2744
    %v2746 = vpop.f32.mrb[0].mxu0
    %v2747 = vadd.f32 %v2643, %v2746
    %v2748 = vpop.f32.mrb[0].mxu0
    %2749 = vdwg.mxu0
    %v2750 = vmul.f32 %v1019, %v1019
    %v2751 = vmul.f32 %v1883, %v2747
    %v2752 = vadd.f32 %v2751, 1e-06
    %v2753 = vrcp.pop %v2752
    %v2754 = vmul.f32 %v2750, %v2753
    %v2755 = vsub.f32 1.0, %v2754
    %vm2756 = vcmp.gt.f32.partialorder %v72, 0.5
    %2758 = vrot.lane.b32.xlu0 %v2755, 3
    %v2759 = vpop.permute.xlu0 %2758
    %v2761 = vsel %vm2756, %v2759, 0.0
    %vm2762 = vcmask 31768
    %v2763 = vsel %vm2762, %v2761, 0.0
    %v2764 = vrot.slane %v2763, 4
    %v2765 = vadd.f32 %v2763, %v2764
    %v2766 = vrot.slane %v2765, 2
    %v2767 = vadd.f32 %v2765, %v2766
    %v2768 = vrot.slane %v2767, 1
    %v2769 = vadd.f32 %v2767, %v2768
    %v2770 = vsel %vm2762, %v72, 0.0
    %v2771 = vrot.slane %v2770, 4
    %v2772 = vadd.f32 %v2770, %v2771
    %v2773 = vrot.slane %v2772, 2
    %v2774 = vadd.f32 %v2772, %v2773
    %v2775 = vrot.slane %v2774, 1
    %v2776 = vadd.f32 %v2774, %v2775
    %2778 = vset.pattern.permute.xlu0 3
    %2779 = vperm.xlu0 %2778, %v2769
    %v2780 = vpop.permute.xlu0 %2779
    %2782 = vst [vmem:[#allocation10] sm:$0x1] %v2780
    %2784 = vset.pattern.permute.xlu0 3
    %2785 = vperm.xlu0 %2784, %v2776
    %v2786 = vpop.permute.xlu0 %2785
    %2788 = vst [vmem:[#allocation11] sm:$0x1] %v2786
    // Predicated region
    $region34: #{tpu_custom_call.1} parent=1 // pred_check
      _
    $region35: #{tpu_custom_call.1} parent=1 // pred_check_branch
      %2790 = sbr.rel (0) target = $region37
    $region36: #{tpu_custom_call.1} parent=1 // pred_region
      %s2792 = ssub.s32 16, 16
      %2793 = vsyncadd [#allocation4], %s2792
      %s2795 = sshll.u32 [#allocation10], 4
      %s2796 = int_to_ptr.vmem [resolvable:$true] %s2795
      %2798 = dma.vmem_to_hbm [thread:$0]  %s2796, 16, %s4, [#allocation4]
    $region37: #{tpu_custom_call.1} parent=1 // pred_fallthru
      _
    // Predicated region
    $region38: #{tpu_custom_call.1} parent=1 // pred_check
      _
    $region39: #{tpu_custom_call.1} parent=1 // pred_check_branch
      %2800 = sbr.rel (0) target = $region41
    $region40: #{tpu_custom_call.1} parent=1 // pred_region
      %s2802 = ssub.s32 16, 16
      %2803 = vsyncadd [#allocation12], %s2802
      %s2805 = sshll.u32 [#allocation11], 4
      %s2806 = int_to_ptr.vmem [resolvable:$true] %s2805
      %2808 = dma.vmem_to_hbm [thread:$0]  %s2806, 16, %s5, [#allocation12]
    $region41: #{tpu_custom_call.1} parent=1 // pred_fallthru
      _
    // Predicated region
    $region42: #{tpu_custom_call.1} parent=1 // pred_check
      _
    $region43: #{tpu_custom_call.1} parent=1 // pred_check_branch
      %2810 = sbr.rel (0) target = $region45
    $region44: #{tpu_custom_call.1} parent=1 // pred_region
      %2811 = dma.done [#allocation4], 16
    $region45: #{tpu_custom_call.1} parent=1 // pred_fallthru
      _
    // Predicated region
    $region46: #{tpu_custom_call.1} parent=1 // pred_check
      _
    $region47: #{tpu_custom_call.1} parent=1 // pred_check_branch
      %2813 = sbr.rel (0) target = $region49
    $region48: #{tpu_custom_call.1} parent=1 // pred_region
      %2814 = dma.done [#allocation12], 16
    $region49: #{tpu_custom_call.1} parent=1 // pred_fallthru
      _
    %2815 = vsyncpa [#allocation3], 1
    %2816 = vsyncpa [#allocation6], 1
    %2817 = vsyncpa [#allocation9], 1
    %2818 = vsyncpa [#allocation4], 1
    %2819 = vsyncpa [#allocation12], 1

</llo_original>
